<compile_context>
chip_gen: v6e
topology: v6e:2x2x1
jax: 0.10.0
libtpu: 0.0.40
codegen_flags: <defaults>
</compile_context>

<pallas_src>
import math

import jax
import jax.numpy as jnp
from jax.experimental import pallas as pl
from jax.experimental.pallas import tpu as pltpu

# Activation schedule straight from the nn.Sequential definitions.
ACTOR_ACTS = ("tanh", "tanh", "relu", "tanh", "relu", "relu", "tanh", "tanh")
CRITIC_ACTS = ("tanh", "relu", "relu", "tanh", "relu", "relu", "tanh", "none")
N_LAYERS = 8
LOG2PI = math.log(2.0 * math.pi)


def _round_up(x, m):
    return ((x + m - 1) // m) * m


def _act(y, kind):
    if kind == "tanh":
        return jnp.tanh(y)
    if kind == "relu":
        return jnp.maximum(y, 0.0)
    return y


def make_actor_critic_kernel(matmul_dtype, n_as, n_cs):
    """Fused actor+critic forward: one block-diagonal matmul per layer."""

    def kernel(state_ref, action_ref, nhiv_ref, bias_ref, *refs):
        w_refs = refs[:-1]
        out_ref = refs[-1]

        h = state_ref[...]                                    # (TB, S) f32
        action_mean = None
        value = None
        for i in range(N_LAYERS):
            n_a, n_c = n_as[i], n_cs[i]
            n_out = n_a + n_c
            b = bias_ref[pl.ds(i, 1), pl.ds(0, n_out)]        # (1, n_out) f32
            # bf16 x bf16 -> f32 MXU accumulation; hidden state kept in f32 and
            # cast right at the dot (no bf16 VPU/EUP converts on v5e).
            y = jnp.dot(h.astype(matmul_dtype), w_refs[i][...],
                        preferred_element_type=jnp.float32) + b
            if i + 1 < N_LAYERS:
                act_a, act_c = ACTOR_ACTS[i], CRITIC_ACTS[i]
                if act_a == act_c:
                    h = _act(y, act_a)
                else:
                    # per-lane activation select: actor lanes are [0, n_a)
                    col = jax.lax.broadcasted_iota(jnp.int32, y.shape, 1)
                    h = jnp.where(col < n_a, _act(y, act_a), _act(y, act_c))
            else:
                action_mean = jnp.tanh(y[:, :n_a])            # (TB, A)
                value = y[:, n_a:n_a + n_c]                   # (TB, 1)

        # -0.5 * (a - mu)^T Sigma^-1 (a - mu); -0.5/var pre-folded into nhiv.
        diff = action_ref[...] - action_mean
        lp_core = jnp.sum(diff * diff * nhiv_ref[...], axis=-1, keepdims=True)

        # Small (TB, 2) output block: col 0 = -0.5*maha, col 1 = critic value.
        col = jax.lax.broadcasted_iota(jnp.int32, out_ref.shape[1:], 1)
        out_ref[0] = jnp.where(col == 0, lp_core, value)

    return kernel


def _block_diag(wa, wc):
    ka, na = wa.shape
    kc, nc = wc.shape
    top = jnp.concatenate([wa, jnp.zeros((ka, nc), wa.dtype)], axis=1)
    bot = jnp.concatenate([jnp.zeros((kc, na), wc.dtype), wc], axis=1)
    return jnp.concatenate([top, bot], axis=0)


def _tile_cap():
    # 128 on v5e (128-wide MXU, weaker ld/st slots); 512 elsewhere (amortises
    # per-grid-step overhead; VMEM is nowhere near a constraint).
    try:
        kind = jax.devices()[0].device_kind.lower()
    except Exception:
        return 512
    if "v5 lite" in kind or "v5e" in kind or "v5lite" in kind:
        return 128
    return 512


def actor_critic_evaluate(state, action, action_var, actor_params, critic_params,
                          *, tile_b=None, matmul_dtype=jnp.bfloat16):
    """Pallas equivalent of ActorCritic.evaluate -> (logprobs, value, entropy)."""
    B, S = state.shape
    A = action.shape[1]

    n_as = tuple(int(w.shape[1]) for w, _ in actor_params)
    n_cs = tuple(int(w.shape[1]) for w, _ in critic_params)

    # ---- batch tiling -------------------------------------------------------
    if tile_b is None:
        cap = _tile_cap()
        if B <= 32:
            # single tiny tile (act()-style calls); 16-row multiple for bf16 packing
            # TODO(synk): per-core actor/critic split (core_map) would use both
            # v7x TensorCores even at grid=(1,); not applied here.
            tile_b = _round_up(B, 16)
        else:
            # >= 2 grid steps up to 2*cap so ("parallel",) shards the batch
            # across both v7x TensorCores; also limits padding waste.
            tile_b = min(cap, _round_up((B + 1) // 2, 16))
    B_pad = _round_up(B, tile_b)
    num_tiles = B_pad // tile_b
    grid = (num_tiles,)

    state = jnp.asarray(state, jnp.float32)
    action = jnp.asarray(action, jnp.float32)
    if B_pad != B:
        pad = B_pad - B
        state = jnp.pad(state, ((0, pad), (0, 0)))
        action = jnp.pad(action, ((0, pad), (0, 0)))

    action_var = jnp.asarray(action_var, jnp.float32).reshape(1, A)

    # ---- batch-constant Gaussian math hoisted out of the kernel -------------
    logdet = jnp.sum(jnp.log(action_var))
    lp_const = -0.5 * (A * LOG2PI) - 0.5 * logdet             # scalar
    entropy = 0.5 * A * (1.0 + LOG2PI) + 0.5 * logdet         # scalar
    neg_half_inv_var = -0.5 / action_var                      # (1, A)

    # ---- block-diagonal actor+critic packing (one matmul per layer) ---------
    packed_ws = []
    bias_rows = []
    for i, ((wa, ba), (wc, bc)) in enumerate(zip(actor_params, critic_params)):
        wa = jnp.asarray(wa, jnp.float32)
        wc = jnp.asarray(wc, jnp.float32)
        if i == 0:
            w = jnp.concatenate([wa, wc], axis=1)             # shared `state` input
        else:
            w = _block_diag(wa, wc)
        packed_ws.append(w.astype(matmul_dtype))
        bias_rows.append(jnp.concatenate(
            [jnp.asarray(ba, jnp.float32).reshape(-1),
             jnp.asarray(bc, jnp.float32).reshape(-1)]))

    max_w = _round_up(max(int(r.shape[0]) for r in bias_rows), 128)
    bias_slab = jnp.stack(
        [jnp.pad(r, (0, max_w - r.shape[0])) for r in bias_rows])   # (8, max_w) f32

    batch_map = lambda i: (i, 0)
    const_map = lambda i: (0, 0)   # constant block index -> resident in VMEM

    in_specs = [
        pl.BlockSpec((tile_b, S), batch_map),
        pl.BlockSpec((tile_b, A), batch_map),
        pl.BlockSpec((1, A), const_map),
        pl.BlockSpec((N_LAYERS, max_w), const_map),
    ] + [pl.BlockSpec(tuple(w.shape), const_map) for w in packed_ws]

    out_specs = pl.BlockSpec((1, tile_b, 2), lambda i: (i, 0, 0))
    out_shape = jax.ShapeDtypeStruct((num_tiles, tile_b, 2), jnp.float32)

    # ---- advisory cost estimate ---------------------------------------------
    flops = 0
    transcendentals = 0
    bytes_accessed = (int(state.size) + int(action.size)) * 4
    bytes_accessed += int(bias_slab.size) * 4 + A * 4 + B_pad * 2 * 4
    for i, w in enumerate(packed_ws):
        flops += 2 * B_pad * int(w.shape[0]) * int(w.shape[1])
        bytes_accessed += int(w.size) * int(w.dtype.itemsize)
        if ACTOR_ACTS[i] == "tanh":
            transcendentals += B_pad * n_as[i]
        if CRITIC_ACTS[i] == "tanh":
            transcendentals += B_pad * n_cs[i]

    out = pl.pallas_call(
        make_actor_critic_kernel(matmul_dtype, n_as, n_cs),
        grid=grid,
        out_shape=out_shape,
        in_specs=in_specs,
        out_specs=out_specs,
        compiler_params=pltpu.CompilerParams(
            dimension_semantics=("parallel",),
            vmem_limit_bytes=32 * 1024 * 1024,
        ),
        cost_estimate=pl.CostEstimate(
            flops=flops,
            transcendentals=transcendentals,
            bytes_accessed=bytes_accessed,
        ),
    )(state, action, neg_half_inv_var, bias_slab, *packed_ws)

    out = out.reshape(B_pad, 2)
    logprobs = out[:B, 0] + lp_const
    values = out[:B, 1]
    entropy_b = jnp.broadcast_to(entropy, (B,))
    return logprobs, values, entropy_b


# ------------------------- pure-JAX reference (for the correctness checks) ---

def reference_evaluate(state, action, action_var, actor_params, critic_params):
    def mlp(x, params, acts):
        h = x
        for (w, b), act in zip(params, acts):
            h = jnp.dot(h, w, preferred_element_type=jnp.float32,
                        precision=jax.lax.Precision.HIGHEST) + jnp.reshape(b, (1, -1))
            if act == "tanh":
                h = jnp.tanh(h)
            elif act == "relu":
                h = jnp.maximum(h, 0.0)
        return h

    A = action.shape[1]
    action_mean = mlp(state, actor_params, ACTOR_ACTS)
    value = mlp(state, critic_params, CRITIC_ACTS)[:, 0]
    var = action_var.reshape(1, A)
    diff = action - action_mean
    maha = jnp.sum(diff * diff / var, axis=-1)
    logdet = jnp.sum(jnp.log(var))
    lp = -0.5 * (maha + A * LOG2PI + logdet)
    ent = 0.5 * A * (1.0 + LOG2PI) + 0.5 * logdet
    return lp, value, jnp.broadcast_to(ent, lp.shape)


def init_linear(key, in_dim, out_dim):
    """Deterministic PyTorch-default-like init, stored as (in, out) / (1, out)."""
    kw, kb = jax.random.split(key)
    bound = 1.0 / math.sqrt(in_dim)
    w = jax.random.uniform(kw, (in_dim, out_dim), jnp.float32, -bound, bound)
    b = jax.random.uniform(kb, (1, out_dim), jnp.float32, -bound, bound)
    return w, b


if __name__ == "__main__":
    state_dim, action_dim, action_std = 4, 2, 0.5

    actor_dims = [state_dim, 32, 64, 128, 256, 128, 64, 32, action_dim]
    critic_dims = [state_dim, 32, 64, 128, 256, 128, 64, 32, 1]
    pkeys = jax.random.split(jax.random.PRNGKey(42), 2 * N_LAYERS)
    actor_params = [
        init_linear(pkeys[i], actor_dims[i], actor_dims[i + 1]) for i in range(N_LAYERS)
    ]
    critic_params = [
        init_linear(pkeys[N_LAYERS + i], critic_dims[i], critic_dims[i + 1])
        for i in range(N_LAYERS)
    ]
    action_var = jnp.full((action_dim,), action_std * action_std, jnp.float32)

    # TODO(synk): dist.sample() in act() is a stochastic draw outside the hot path;
    # not reproduced here (evaluate() semantics are the deterministic forward).

    key = jax.random.PRNGKey(0)
    for batch in (8, 160):   # single-tile path and multi-tile (grid >= 2) path
        k_state, k_action = jax.random.split(jax.random.fold_in(key, batch))
        state = jax.random.normal(k_state, (batch, state_dim), jnp.float32)
        action = jax.random.normal(k_action, (batch, action_dim), jnp.float32)

        lp_ref, val_ref, ent_ref = reference_evaluate(
            state, action, action_var, actor_params, critic_params)

        # f32 matmul mode vs. pure-JAX reference.
        lp32, val32, ent32 = actor_critic_evaluate(
            state, action, action_var, actor_params, critic_params,
            matmul_dtype=jnp.float32)
        jax.block_until_ready((lp32, val32, ent32))
        assert lp32.shape == (batch,) and val32.shape == (batch,) and ent32.shape == (batch,)
        assert bool(jnp.allclose(lp32, lp_ref, atol=5e-2, rtol=5e-3))
        assert bool(jnp.allclose(val32, val_ref, atol=5e-2, rtol=5e-3))
        assert bool(jnp.allclose(ent32, ent_ref, atol=1e-5, rtol=1e-5))

        # Production path: bf16 matmuls / f32 accumulation (hidden state in f32),
        # now explicitly tolerance-checked against the reference.
        lp16, val16, ent16 = actor_critic_evaluate(
            state, action, action_var, actor_params, critic_params)
        jax.block_until_ready((lp16, val16, ent16))
        assert lp16.shape == (batch,) and val16.shape == (batch,) and ent16.shape == (batch,)
        assert bool(jnp.all(jnp.isfinite(lp16)))
        assert bool(jnp.all(jnp.isfinite(val16)))
        assert bool(jnp.all(jnp.isfinite(ent16)))
        assert bool(jnp.allclose(lp16, lp_ref, atol=0.15, rtol=0.05))
        assert bool(jnp.allclose(val16, val_ref, atol=0.1, rtol=0.05))
        assert bool(jnp.allclose(ent16, ent_ref, atol=1e-5, rtol=1e-5))

    print("KERNEL_OK")
</pallas_src>

<mosaic_0001>
module attributes {stable_mosaic.version = 11 : i64} {
  func.func @kernel(%arg0: i32, %arg1: memref<16x4xf32, #tpu.memory_space<vmem>>, %arg2: memref<16x2xf32, #tpu.memory_space<vmem>>, %arg3: memref<1x2xf32, #tpu.memory_space<vmem>>, %arg4: memref<8x512xf32, #tpu.memory_space<vmem>>, %arg5: memref<4x64xf32, #tpu.memory_space<vmem>>, %arg6: memref<64x128xf32, #tpu.memory_space<vmem>>, %arg7: memref<128x256xf32, #tpu.memory_space<vmem>>, %arg8: memref<256x512xf32, #tpu.memory_space<vmem>>, %arg9: memref<512x256xf32, #tpu.memory_space<vmem>>, %arg10: memref<256x128xf32, #tpu.memory_space<vmem>>, %arg11: memref<128x64xf32, #tpu.memory_space<vmem>>, %arg12: memref<64x3xf32, #tpu.memory_space<vmem>>, %arg13: memref<1x16x2xf32, #tpu.memory_space<vmem>>) attributes {dimension_semantics = [#tpu.dimension_semantics<parallel>], iteration_bounds = array<i64: 1>, scalar_prefetch = 0 : i64, scratch_operands = 0 : i64, tpu.core_type = #tpu.core_type<tc>, window_params = [{transform_indices = @transform_0, window_bounds = array<i64: 16, 4>}, {transform_indices = @transform_1, window_bounds = array<i64: 16, 2>}, {pipeline_mode = #tpu.pipeline_mode<synchronous>, transform_indices = @transform_2, window_bounds = array<i64: 1, 2>}, {pipeline_mode = #tpu.pipeline_mode<synchronous>, transform_indices = @transform_3, window_bounds = array<i64: 8, 512>}, {pipeline_mode = #tpu.pipeline_mode<synchronous>, transform_indices = @transform_4, window_bounds = array<i64: 4, 64>}, {pipeline_mode = #tpu.pipeline_mode<synchronous>, transform_indices = @transform_5, window_bounds = array<i64: 64, 128>}, {pipeline_mode = #tpu.pipeline_mode<synchronous>, transform_indices = @transform_6, window_bounds = array<i64: 128, 256>}, {pipeline_mode = #tpu.pipeline_mode<synchronous>, transform_indices = @transform_7, window_bounds = array<i64: 256, 512>}, {pipeline_mode = #tpu.pipeline_mode<synchronous>, transform_indices = @transform_8, window_bounds = array<i64: 512, 256>}, {pipeline_mode = #tpu.pipeline_mode<synchronous>, transform_indices = @transform_9, window_bounds = array<i64: 256, 128>}, {pipeline_mode = #tpu.pipeline_mode<synchronous>, transform_indices = @transform_10, window_bounds = array<i64: 128, 64>}, {pipeline_mode = #tpu.pipeline_mode<synchronous>, transform_indices = @transform_11, window_bounds = array<i64: 64, 3>}, {transform_indices = @transform_12, window_bounds = array<i64: 1, 16, 2>}]} {
    %c0 = arith.constant 0 : index
    %c0_0 = arith.constant 0 : index
    %0 = vector.load %arg1[%c0, %c0_0] : memref<16x4xf32, #tpu.memory_space<vmem>>, vector<16x4xf32>
    %c0_1 = arith.constant 0 : index
    %c0_2 = arith.constant 0 : index
    %1 = vector.load %arg4[%c0_1, %c0_2] : memref<8x512xf32, #tpu.memory_space<vmem>>, vector<1x64xf32>
    %c0_3 = arith.constant 0 : index
    %c0_4 = arith.constant 0 : index
    %2 = vector.load %arg5[%c0_3, %c0_4] : memref<4x64xf32, #tpu.memory_space<vmem>>, vector<4x64xf32>
    %cst = arith.constant dense<0.000000e+00> : vector<16x64xf32>
    %3 = tpu.matmul %0, %2, %cst {dimension_numbers = #tpu.dot_dimension_numbers<[1], [0], [0], [1], [0, 0, 1, 1], [], []>} : vector<16x4xf32>, vector<4x64xf32>, vector<16x64xf32> -> vector<16x64xf32>
    %4 = vector.broadcast %1 : vector<1x64xf32> to vector<16x64xf32>
    %5 = arith.addf %3, %4 : vector<16x64xf32>
    %6 = math.tanh %5 : vector<16x64xf32>
    %c1 = arith.constant 1 : index
    %c0_5 = arith.constant 0 : index
    %7 = vector.load %arg4[%c1, %c0_5] : memref<8x512xf32, #tpu.memory_space<vmem>>, vector<1x128xf32>
    %c0_6 = arith.constant 0 : index
    %c0_7 = arith.constant 0 : index
    %8 = vector.load %arg6[%c0_6, %c0_7] : memref<64x128xf32, #tpu.memory_space<vmem>>, vector<64x128xf32>
    %cst_8 = arith.constant dense<0.000000e+00> : vector<16x128xf32>
    %9 = tpu.matmul %6, %8, %cst_8 {dimension_numbers = #tpu.dot_dimension_numbers<[1], [0], [0], [1], [0, 0, 1, 1], [], []>} : vector<16x64xf32>, vector<64x128xf32>, vector<16x128xf32> -> vector<16x128xf32>
    %10 = vector.broadcast %7 : vector<1x128xf32> to vector<16x128xf32>
    %11 = arith.addf %9, %10 : vector<16x128xf32>
    %12 = tpu.iota {dimensions = array<i32: 1>} : vector<16x128xi32>
    %c64_i32 = arith.constant 64 : i32
    %13 = vector.broadcast %c64_i32 : i32 to vector<16x128xi32>
    %14 = arith.cmpi slt, %12, %13 : vector<16x128xi32>
    %15 = math.tanh %11 : vector<16x128xf32>
    %cst_9 = arith.constant 0.000000e+00 : f32
    %16 = vector.broadcast %cst_9 : f32 to vector<16x128xf32>
    %17 = arith.maximumf %11, %16 : vector<16x128xf32>
    %18 = arith.select %14, %15, %17 : vector<16x128xi1>, vector<16x128xf32>
    %c2 = arith.constant 2 : index
    %c0_10 = arith.constant 0 : index
    %19 = vector.load %arg4[%c2, %c0_10] : memref<8x512xf32, #tpu.memory_space<vmem>>, vector<1x256xf32>
    %c0_11 = arith.constant 0 : index
    %c0_12 = arith.constant 0 : index
    %20 = vector.load %arg7[%c0_11, %c0_12] : memref<128x256xf32, #tpu.memory_space<vmem>>, vector<128x256xf32>
    %cst_13 = arith.constant dense<0.000000e+00> : vector<16x256xf32>
    %21 = tpu.matmul %18, %20, %cst_13 {dimension_numbers = #tpu.dot_dimension_numbers<[1], [0], [0], [1], [0, 0, 1, 1], [], []>} : vector<16x128xf32>, vector<128x256xf32>, vector<16x256xf32> -> vector<16x256xf32>
    %22 = vector.broadcast %19 : vector<1x256xf32> to vector<16x256xf32>
    %23 = arith.addf %21, %22 : vector<16x256xf32>
    %cst_14 = arith.constant 0.000000e+00 : f32
    %24 = vector.broadcast %cst_14 : f32 to vector<16x256xf32>
    %25 = arith.maximumf %23, %24 : vector<16x256xf32>
    %c3 = arith.constant 3 : index
    %c0_15 = arith.constant 0 : index
    %26 = vector.load %arg4[%c3, %c0_15] : memref<8x512xf32, #tpu.memory_space<vmem>>, vector<1x512xf32>
    %c0_16 = arith.constant 0 : index
    %c0_17 = arith.constant 0 : index
    %27 = vector.load %arg8[%c0_16, %c0_17] : memref<256x512xf32, #tpu.memory_space<vmem>>, vector<256x512xf32>
    %cst_18 = arith.constant dense<0.000000e+00> : vector<16x512xf32>
    %28 = tpu.matmul %25, %27, %cst_18 {dimension_numbers = #tpu.dot_dimension_numbers<[1], [0], [0], [1], [0, 0, 1, 1], [], []>} : vector<16x256xf32>, vector<256x512xf32>, vector<16x512xf32> -> vector<16x512xf32>
    %29 = vector.broadcast %26 : vector<1x512xf32> to vector<16x512xf32>
    %30 = arith.addf %28, %29 : vector<16x512xf32>
    %31 = math.tanh %30 : vector<16x512xf32>
    %c4 = arith.constant 4 : index
    %c0_19 = arith.constant 0 : index
    %32 = vector.load %arg4[%c4, %c0_19] : memref<8x512xf32, #tpu.memory_space<vmem>>, vector<1x256xf32>
    %c0_20 = arith.constant 0 : index
    %c0_21 = arith.constant 0 : index
    %33 = vector.load %arg9[%c0_20, %c0_21] : memref<512x256xf32, #tpu.memory_space<vmem>>, vector<512x256xf32>
    %cst_22 = arith.constant dense<0.000000e+00> : vector<16x256xf32>
    %34 = tpu.matmul %31, %33, %cst_22 {dimension_numbers = #tpu.dot_dimension_numbers<[1], [0], [0], [1], [0, 0, 1, 1], [], []>} : vector<16x512xf32>, vector<512x256xf32>, vector<16x256xf32> -> vector<16x256xf32>
    %35 = vector.broadcast %32 : vector<1x256xf32> to vector<16x256xf32>
    %36 = arith.addf %34, %35 : vector<16x256xf32>
    %cst_23 = arith.constant 0.000000e+00 : f32
    %37 = vector.broadcast %cst_23 : f32 to vector<16x256xf32>
    %38 = arith.maximumf %36, %37 : vector<16x256xf32>
    %c5 = arith.constant 5 : index
    %c0_24 = arith.constant 0 : index
    %39 = vector.load %arg4[%c5, %c0_24] : memref<8x512xf32, #tpu.memory_space<vmem>>, vector<1x128xf32>
    %c0_25 = arith.constant 0 : index
    %c0_26 = arith.constant 0 : index
    %40 = vector.load %arg10[%c0_25, %c0_26] : memref<256x128xf32, #tpu.memory_space<vmem>>, vector<256x128xf32>
    %cst_27 = arith.constant dense<0.000000e+00> : vector<16x128xf32>
    %41 = tpu.matmul %38, %40, %cst_27 {dimension_numbers = #tpu.dot_dimension_numbers<[1], [0], [0], [1], [0, 0, 1, 1], [], []>} : vector<16x256xf32>, vector<256x128xf32>, vector<16x128xf32> -> vector<16x128xf32>
    %42 = vector.broadcast %39 : vector<1x128xf32> to vector<16x128xf32>
    %43 = arith.addf %41, %42 : vector<16x128xf32>
    %cst_28 = arith.constant 0.000000e+00 : f32
    %44 = vector.broadcast %cst_28 : f32 to vector<16x128xf32>
    %45 = arith.maximumf %43, %44 : vector<16x128xf32>
    %c6 = arith.constant 6 : index
    %c0_29 = arith.constant 0 : index
    %46 = vector.load %arg4[%c6, %c0_29] : memref<8x512xf32, #tpu.memory_space<vmem>>, vector<1x64xf32>
    %c0_30 = arith.constant 0 : index
    %c0_31 = arith.constant 0 : index
    %47 = vector.load %arg11[%c0_30, %c0_31] : memref<128x64xf32, #tpu.memory_space<vmem>>, vector<128x64xf32>
    %cst_32 = arith.constant dense<0.000000e+00> : vector<16x64xf32>
    %48 = tpu.matmul %45, %47, %cst_32 {dimension_numbers = #tpu.dot_dimension_numbers<[1], [0], [0], [1], [0, 0, 1, 1], [], []>} : vector<16x128xf32>, vector<128x64xf32>, vector<16x64xf32> -> vector<16x64xf32>
    %49 = vector.broadcast %46 : vector<1x64xf32> to vector<16x64xf32>
    %50 = arith.addf %48, %49 : vector<16x64xf32>
    %51 = math.tanh %50 : vector<16x64xf32>
    %c7 = arith.constant 7 : index
    %c0_33 = arith.constant 0 : index
    %52 = vector.load %arg4[%c7, %c0_33] : memref<8x512xf32, #tpu.memory_space<vmem>>, vector<1x3xf32>
    %c0_34 = arith.constant 0 : index
    %c0_35 = arith.constant 0 : index
    %53 = vector.load %arg12[%c0_34, %c0_35] : memref<64x3xf32, #tpu.memory_space<vmem>>, vector<64x3xf32>
    %cst_36 = arith.constant dense<0.000000e+00> : vector<16x3xf32>
    %54 = tpu.matmul %51, %53, %cst_36 {dimension_numbers = #tpu.dot_dimension_numbers<[1], [0], [0], [1], [0, 0, 1, 1], [], []>} : vector<16x64xf32>, vector<64x3xf32>, vector<16x3xf32> -> vector<16x3xf32>
    %55 = vector.broadcast %52 : vector<1x3xf32> to vector<16x3xf32>
    %56 = arith.addf %54, %55 : vector<16x3xf32>
    %57 = vector.extract_strided_slice %56 {offsets = [0, 0], sizes = [16, 2], strides = [1, 1]} : vector<16x3xf32> to vector<16x2xf32>
    %58 = math.tanh %57 : vector<16x2xf32>
    %59 = vector.extract_strided_slice %56 {offsets = [0, 2], sizes = [16, 1], strides = [1, 1]} : vector<16x3xf32> to vector<16x1xf32>
    %c0_37 = arith.constant 0 : index
    %c0_38 = arith.constant 0 : index
    %60 = vector.load %arg2[%c0_37, %c0_38] : memref<16x2xf32, #tpu.memory_space<vmem>>, vector<16x2xf32>
    %61 = arith.subf %60, %58 : vector<16x2xf32>
    %62 = arith.mulf %61, %61 : vector<16x2xf32>
    %c0_39 = arith.constant 0 : index
    %c0_40 = arith.constant 0 : index
    %63 = vector.load %arg3[%c0_39, %c0_40] : memref<1x2xf32, #tpu.memory_space<vmem>>, vector<1x2xf32>
    %64 = vector.broadcast %63 : vector<1x2xf32> to vector<16x2xf32>
    %65 = arith.mulf %62, %64 : vector<16x2xf32>
    %cst_41 = arith.constant dense<0.000000e+00> : vector<16xf32>
    %66 = vector.multi_reduction <add>, %65, %cst_41 [1] : vector<16x2xf32> to vector<16xf32>
    %67 = vector.shape_cast %66 : vector<16xf32> to vector<16x1xf32>
    %68 = tpu.iota {dimensions = array<i32: 1>} : vector<16x2xi32>
    %c0_i32 = arith.constant 0 : i32
    %69 = vector.broadcast %c0_i32 : i32 to vector<16x2xi32>
    %70 = arith.cmpi eq, %68, %69 : vector<16x2xi32>
    %71 = vector.shape_cast %67 : vector<16x1xf32> to vector<16x1xf32>
    %72 = vector.broadcast %71 : vector<16x1xf32> to vector<16x2xf32>
    %73 = vector.shape_cast %59 : vector<16x1xf32> to vector<16x1xf32>
    %74 = vector.broadcast %73 : vector<16x1xf32> to vector<16x2xf32>
    %75 = arith.select %70, %72, %74 : vector<16x2xi1>, vector<16x2xf32>
    %c0_42 = arith.constant 0 : index
    %c0_43 = arith.constant 0 : index
    %c0_44 = arith.constant 0 : index
    %76 = vector.load %arg13[%c0_42, %c0_43, %c0_44] : memref<1x16x2xf32, #tpu.memory_space<vmem>>, vector<1x16x2xf32>
    %77 = vector.shape_cast %76 : vector<1x16x2xf32> to vector<16x2xf32>
    %78 = vector.shape_cast %75 : vector<16x2xf32> to vector<1x16x2xf32>
    tpu.vector_store %arg13[%c0_42, %c0_43, %c0_44], %78 {strides = array<i32>} : memref<1x16x2xf32, #tpu.memory_space<vmem>>, vector<1x16x2xf32>,
    return
  }
  func.func @transform_0(%arg0: i32) -> (i32, i32) {
    %c0_i32 = arith.constant 0 : i32
    %c0_i32_0 = arith.constant 0 : i32
    return %arg0, %c0_i32 : i32, i32
  }
  func.func @transform_1(%arg0: i32) -> (i32, i32) {
    %c0_i32 = arith.constant 0 : i32
    %c0_i32_0 = arith.constant 0 : i32
    return %arg0, %c0_i32 : i32, i32
  }
  func.func @transform_2(%arg0: i32) -> (i32, i32) {
    %c0_i32 = arith.constant 0 : i32
    %c0_i32_0 = arith.constant 0 : i32
    %c0_i32_1 = arith.constant 0 : i32
    return %c0_i32, %c0_i32_0 : i32, i32
  }
  func.func @transform_3(%arg0: i32) -> (i32, i32) {
    %c0_i32 = arith.constant 0 : i32
    %c0_i32_0 = arith.constant 0 : i32
    %c0_i32_1 = arith.constant 0 : i32
    return %c0_i32, %c0_i32_0 : i32, i32
  }
  func.func @transform_4(%arg0: i32) -> (i32, i32) {
    %c0_i32 = arith.constant 0 : i32
    %c0_i32_0 = arith.constant 0 : i32
    %c0_i32_1 = arith.constant 0 : i32
    return %c0_i32, %c0_i32_0 : i32, i32
  }
  func.func @transform_5(%arg0: i32) -> (i32, i32) {
    %c0_i32 = arith.constant 0 : i32
    %c0_i32_0 = arith.constant 0 : i32
    %c0_i32_1 = arith.constant 0 : i32
    return %c0_i32, %c0_i32_0 : i32, i32
  }
  func.func @transform_6(%arg0: i32) -> (i32, i32) {
    %c0_i32 = arith.constant 0 : i32
    %c0_i32_0 = arith.constant 0 : i32
    %c0_i32_1 = arith.constant 0 : i32
    return %c0_i32, %c0_i32_0 : i32, i32
  }
  func.func @transform_7(%arg0: i32) -> (i32, i32) {
    %c0_i32 = arith.constant 0 : i32
    %c0_i32_0 = arith.constant 0 : i32
    %c0_i32_1 = arith.constant 0 : i32
    return %c0_i32, %c0_i32_0 : i32, i32
  }
  func.func @transform_8(%arg0: i32) -> (i32, i32) {
    %c0_i32 = arith.constant 0 : i32
    %c0_i32_0 = arith.constant 0 : i32
    %c0_i32_1 = arith.constant 0 : i32
    return %c0_i32, %c0_i32_0 : i32, i32
  }
  func.func @transform_9(%arg0: i32) -> (i32, i32) {
    %c0_i32 = arith.constant 0 : i32
    %c0_i32_0 = arith.constant 0 : i32
    %c0_i32_1 = arith.constant 0 : i32
    return %c0_i32, %c0_i32_0 : i32, i32
  }
  func.func @transform_10(%arg0: i32) -> (i32, i32) {
    %c0_i32 = arith.constant 0 : i32
    %c0_i32_0 = arith.constant 0 : i32
    %c0_i32_1 = arith.constant 0 : i32
    return %c0_i32, %c0_i32_0 : i32, i32
  }
  func.func @transform_11(%arg0: i32) -> (i32, i32) {
    %c0_i32 = arith.constant 0 : i32
    %c0_i32_0 = arith.constant 0 : i32
    %c0_i32_1 = arith.constant 0 : i32
    return %c0_i32, %c0_i32_0 : i32, i32
  }
  func.func @transform_12(%arg0: i32) -> (i32, i32, i32) {
    %c0_i32 = arith.constant 0 : i32
    %c0_i32_0 = arith.constant 0 : i32
    %c0_i32_1 = arith.constant 0 : i32
    return %arg0, %c0_i32, %c0_i32_0 : i32, i32, i32
  }
}

</mosaic_0001>

<llo_original>
// kernel: tpu_custom_call.1
$region0: #{tpu_custom_call.1}
  #allocation0 [shape = 'u32[]', space=smem, size = 0x4, offset = 0x4, fixed_abs, tag = 'smem constant byte address 0x4 - core index']
  #allocation1 [shape = 'u32[144,128]{1,0:T(1,128)}', space=vmem, size = 0x12000, scoped, tag = 'internal scratch']
  %s0 = inlined_call_operand.vmem [shape: f32[16,4], index: 0, kind: input, shape index: {}]
  %s1 = inlined_call_operand.vmem [shape: f32[16,2], index: 1, kind: input, shape index: {}]
  %s2 = inlined_call_operand.vmem [shape: f32[1,2], index: 2, kind: input, shape index: {}]
  %s3 = inlined_call_operand.vmem [shape: f32[8,512], index: 3, kind: input, shape index: {}]
  %s4 = inlined_call_operand.vmem [shape: f32[4,64], index: 4, kind: input, shape index: {}]
  %s5 = inlined_call_operand.hbm [shape: f32[64,128], index: 5, kind: input, shape index: {}]
  %s6 = inlined_call_operand.vmem [shape: f32[128,256], index: 6, kind: input, shape index: {}]
  %s7 = inlined_call_operand.hbm [shape: f32[256,512], index: 7, kind: input, shape index: {}]
  %s8 = inlined_call_operand.hbm [shape: f32[512,256], index: 8, kind: input, shape index: {}]
  %s9 = inlined_call_operand.hbm [shape: f32[256,128], index: 9, kind: input, shape index: {}]
  %s10 = inlined_call_operand.vmem [shape: f32[128,64], index: 10, kind: input, shape index: {}]
  %s11 = inlined_call_operand.vmem [shape: f32[64,3], index: 11, kind: input, shape index: {}]
  %s12 = inlined_call_operand.vmem [shape: f32[1,16,2], index: 12, kind: output, shape index: {}]
  %s13 = sld [smem:[#allocation0]]
  $region74: #{tpu_custom_call.1} parent=0
    _
  %s15 = ssub.s32 1, %s13
  %s16 = scalar_select 0, %s15, %s13
  $region1: #{tpu_custom_call.1} parent=0
    #allocation2 [shape = 'u8[32768]{0}', space=vmem, size = 0x8000, scoped, tag = 'input window, operand 5, single buffered']
    #allocation3 [shape = 's32[1]{0}', space=sflag, size = 0x4, scoped, tag = 'scoped memory for tpu_custom_call.1']
    #allocation4 [shape = 'u8[524288]{0}', space=vmem, size = 0x80000, scoped, tag = 'input window, operand 7, single buffered']
    #allocation5 [shape = 's32[1]{0}', space=sflag, size = 0x4, scoped, tag = 'scoped memory for tpu_custom_call.1']
    #allocation6 [shape = 'u8[524288]{0}', space=vmem, size = 0x80000, scoped, tag = 'input window, operand 8, single buffered']
    #allocation7 [shape = 'u8[131072]{0}', space=vmem, size = 0x20000, scoped, tag = 'input window, operand 9, single buffered']
    #allocation8 [shape = 's32[1]{0}', space=sflag, size = 0x4, scoped, tag = 'scoped memory for tpu_custom_call.1']
    %17 = vsyncpa [#allocation3], 0
    %18 = vsyncpa [#allocation5], 0
    %19 = vsyncpa [#allocation8], 0
    // Predicated region
    $region2: #{tpu_custom_call.1} parent=1 // pred_check
      _
    $region3: #{tpu_custom_call.1} parent=1 // pred_check_branch
      %21 = sbr.rel (0) target = $region5
    $region4: #{tpu_custom_call.1} parent=1 // pred_region
      _
    $region5: #{tpu_custom_call.1} parent=1 // pred_fallthru
      _
    // Predicated region
    $region6: #{tpu_custom_call.1} parent=1 // pred_check
      _
    $region7: #{tpu_custom_call.1} parent=1 // pred_check_branch
      %23 = sbr.rel (0) target = $region9
    $region8: #{tpu_custom_call.1} parent=1 // pred_region
      _
    $region9: #{tpu_custom_call.1} parent=1 // pred_fallthru
      _
    // Predicated region
    $region10: #{tpu_custom_call.1} parent=1 // pred_check
      _
    $region11: #{tpu_custom_call.1} parent=1 // pred_check_branch
      %25 = sbr.rel (0) target = $region13
    $region12: #{tpu_custom_call.1} parent=1 // pred_region
      _
    $region13: #{tpu_custom_call.1} parent=1 // pred_fallthru
      _
    // Predicated region
    $region14: #{tpu_custom_call.1} parent=1 // pred_check
      _
    $region15: #{tpu_custom_call.1} parent=1 // pred_check_branch
      %27 = sbr.rel (0) target = $region17
    $region16: #{tpu_custom_call.1} parent=1 // pred_region
      _
    $region17: #{tpu_custom_call.1} parent=1 // pred_fallthru
      _
    // Predicated region
    $region18: #{tpu_custom_call.1} parent=1 // pred_check
      _
    $region19: #{tpu_custom_call.1} parent=1 // pred_check_branch
      %29 = sbr.rel (0) target = $region21
    $region20: #{tpu_custom_call.1} parent=1 // pred_region
      _
    $region21: #{tpu_custom_call.1} parent=1 // pred_fallthru
      _
    // Predicated region
    $region22: #{tpu_custom_call.1} parent=1 // pred_check
      _
    $region23: #{tpu_custom_call.1} parent=1 // pred_check_branch
      %31 = sbr.rel (0) target = $region25
    $region24: #{tpu_custom_call.1} parent=1 // pred_region
      %s33 = ssub.s32 1024, 1024
      %34 = vsyncadd [#allocation3], %s33
      %s35 = sshll.u32 [#allocation2], 4
      %s36 = int_to_ptr.vmem [resolvable:$true] %s35
      %41 = dma.hbm_to_vmem [thread:$0]  %s5, 1024, %s36, [#allocation3], 128, 128, 8
    $region25: #{tpu_custom_call.1} parent=1 // pred_fallthru
      _
    // Predicated region
    $region26: #{tpu_custom_call.1} parent=1 // pred_check
      _
    $region27: #{tpu_custom_call.1} parent=1 // pred_check_branch
      %43 = sbr.rel (0) target = $region29
    $region28: #{tpu_custom_call.1} parent=1 // pred_region
      _
    $region29: #{tpu_custom_call.1} parent=1 // pred_fallthru
      _
    // Predicated region
    $region30: #{tpu_custom_call.1} parent=1 // pred_check
      _
    $region31: #{tpu_custom_call.1} parent=1 // pred_check_branch
      %45 = sbr.rel (0) target = $region33
    $region32: #{tpu_custom_call.1} parent=1 // pred_region
      %s47 = ssub.s32 16384, 16384
      %48 = vsyncadd [#allocation5], %s47
      %s49 = sshll.u32 [#allocation4], 4
      %s50 = int_to_ptr.vmem [resolvable:$true] %s49
      %55 = dma.hbm_to_vmem [thread:$0]  %s7, 16384, %s50, [#allocation5], 512, 512, 32
    $region33: #{tpu_custom_call.1} parent=1 // pred_fallthru
      _
    // Predicated region
    $region34: #{tpu_custom_call.1} parent=1 // pred_check
      _
    $region35: #{tpu_custom_call.1} parent=1 // pred_check_branch
      %57 = sbr.rel (0) target = $region37
    $region36: #{tpu_custom_call.1} parent=1 // pred_region
      %s59 = ssub.s32 16384, 16384
      %60 = vsyncadd [#allocation5], %s59
      %s61 = sshll.u32 [#allocation6], 4
      %s62 = int_to_ptr.vmem [resolvable:$true] %s61
      %67 = dma.hbm_to_vmem [thread:$0]  %s8, 16384, %s62, [#allocation5], 256, 256, 16
    $region37: #{tpu_custom_call.1} parent=1 // pred_fallthru
      _
    // Predicated region
    $region38: #{tpu_custom_call.1} parent=1 // pred_check
      _
    $region39: #{tpu_custom_call.1} parent=1 // pred_check_branch
      %69 = sbr.rel (0) target = $region41
    $region40: #{tpu_custom_call.1} parent=1 // pred_region
      %s71 = ssub.s32 4096, 4096
      %72 = vsyncadd [#allocation8], %s71
      %s73 = sshll.u32 [#allocation7], 4
      %s74 = int_to_ptr.vmem [resolvable:$true] %s73
      %79 = dma.hbm_to_vmem [thread:$0]  %s9, 4096, %s74, [#allocation8], 128, 128, 8
    $region41: #{tpu_custom_call.1} parent=1 // pred_fallthru
      _
    // Predicated region
    $region42: #{tpu_custom_call.1} parent=1 // pred_check
      _
    $region43: #{tpu_custom_call.1} parent=1 // pred_check_branch
      %81 = sbr.rel (0) target = $region45
    $region44: #{tpu_custom_call.1} parent=1 // pred_region
      _
    $region45: #{tpu_custom_call.1} parent=1 // pred_fallthru
      _
    // Predicated region
    $region46: #{tpu_custom_call.1} parent=1 // pred_check
      _
    $region47: #{tpu_custom_call.1} parent=1 // pred_check_branch
      %83 = sbr.rel (0) target = $region49
    $region48: #{tpu_custom_call.1} parent=1 // pred_region
      _
    $region49: #{tpu_custom_call.1} parent=1 // pred_fallthru
      _
    // Predicated region
    $region50: #{tpu_custom_call.1} parent=1 // pred_check
      _
    $region51: #{tpu_custom_call.1} parent=1 // pred_check_branch
      %85 = sbr.rel (0) target = $region53
    $region52: #{tpu_custom_call.1} parent=1 // pred_region
      %86 = dma.done [#allocation3], 1024
    $region53: #{tpu_custom_call.1} parent=1 // pred_fallthru
      _
    // Predicated region
    $region54: #{tpu_custom_call.1} parent=1 // pred_check
      _
    $region55: #{tpu_custom_call.1} parent=1 // pred_check_branch
      %88 = sbr.rel (0) target = $region57
    $region56: #{tpu_custom_call.1} parent=1 // pred_region
      %89 = dma.done [#allocation5], 16384
    $region57: #{tpu_custom_call.1} parent=1 // pred_fallthru
      _
    // Predicated region
    $region58: #{tpu_custom_call.1} parent=1 // pred_check
      _
    $region59: #{tpu_custom_call.1} parent=1 // pred_check_branch
      %91 = sbr.rel (0) target = $region61
    $region60: #{tpu_custom_call.1} parent=1 // pred_region
      %92 = dma.done [#allocation5], 16384
    $region61: #{tpu_custom_call.1} parent=1 // pred_fallthru
      _
    // Predicated region
    $region62: #{tpu_custom_call.1} parent=1 // pred_check
      _
    $region63: #{tpu_custom_call.1} parent=1 // pred_check_branch
      %94 = sbr.rel (0) target = $region65
    $region64: #{tpu_custom_call.1} parent=1 // pred_region
      %95 = dma.done [#allocation8], 4096
    $region65: #{tpu_custom_call.1} parent=1 // pred_fallthru
      _
    %v96 = vld [vmem:[%s0] sm:$0xff]
    %v97 = vld [vmem:[%s0 + $0x8] sm:$0xff]
    %v98 = vld [vmem:[%s3] ss:$0 sm:$0xff]
    %v99 = vld [vmem:[%s4] sm:$0xf]
    %vm100 = vcmask 31744
    %v102 = vsel %vm100, %v96, 0
    %v105 = vsel %vm100, %v97, 0
    %vm107 = vcmask 1043456
    %v109 = vsel %vm107, %v99, 0
    %111 = vmatprep.subr.mxu0 0.0
    %112 = vmatpush1.msra.mxu0 0.0
    %113 = vmatprep.subr.mxu0 0.0
    %114 = vmatpush1.msra.mxu0 0.0
    %115 = vmatprep.subr.mxu0 0.0
    %116 = vmatpush1.msra.mxu0 0.0
    %117 = vmatprep.subr.mxu0 0.0
    %118 = vmatpush1.msra.mxu0 0.0
    %119 = vmatprep.subr.mxu0 0.0
    %120 = vmatpush1.msra.mxu0 0.0
    %121 = vmatprep.subr.mxu0 0.0
    %122 = vmatpush1.msra.mxu0 0.0
    %123 = vmatprep.subr.mxu0 0.0
    %124 = vmatpush1.msra.mxu0 0.0
    %125 = vmatprep.subr.mxu0 0.0
    %126 = vmatpush1.msra.mxu0 0.0
    %127 = vmatprep.subr.mxu0 0.0
    %128 = vmatpush1.msra.mxu0 0.0
    %129 = vmatprep.subr.mxu0 0.0
    %130 = vmatpush1.msra.mxu0 0.0
    %131 = vmatprep.subr.mxu0 0.0
    %132 = vmatpush1.msra.mxu0 0.0
    %133 = vmatprep.subr.mxu0 0.0
    %134 = vmatpush1.msra.mxu0 0.0
    %135 = vmatprep.subr.mxu0 0.0
    %136 = vmatpush1.msra.mxu0 0.0
    %137 = vmatprep.subr.mxu0 0.0
    %138 = vmatpush1.msra.mxu0 0.0
    %139 = vmatprep.subr.mxu0 0.0
    %140 = vmatpush1.msra.mxu0 0.0
    %141 = vmatprep.subr.mxu0 0.0
    %142 = vmatpush1.msra.mxu0 %v109
    %143 = vmatprep.subr.mxu0 0.0
    %144 = vmatpush2.msra.mxu0 0.0
    %145 = vmatprep.subr.mxu0 0.0
    %146 = vmatpush2.msra.mxu0 0.0
    %147 = vmatprep.subr.mxu0 0.0
    %148 = vmatpush2.msra.mxu0 0.0
    %149 = vmatprep.subr.mxu0 0.0
    %150 = vmatpush2.msra.mxu0 0.0
    %151 = vmatprep.subr.mxu0 0.0
    %152 = vmatpush2.msra.mxu0 0.0
    %153 = vmatprep.subr.mxu0 0.0
    %154 = vmatpush2.msra.mxu0 0.0
    %155 = vmatprep.subr.mxu0 0.0
    %156 = vmatpush2.msra.mxu0 0.0
    %157 = vmatprep.subr.mxu0 0.0
    %158 = vmatpush2.msra.mxu0 0.0
    %159 = vmatprep.subr.mxu0 0.0
    %160 = vmatpush2.msra.mxu0 0.0
    %161 = vmatprep.subr.mxu0 0.0
    %162 = vmatpush2.msra.mxu0 0.0
    %163 = vmatprep.subr.mxu0 0.0
    %164 = vmatpush2.msra.mxu0 0.0
    %165 = vmatprep.subr.mxu0 0.0
    %166 = vmatpush2.msra.mxu0 0.0
    %167 = vmatprep.subr.mxu0 0.0
    %168 = vmatpush2.msra.mxu0 0.0
    %169 = vmatprep.subr.mxu0 0.0
    %170 = vmatpush2.msra.mxu0 0.0
    %171 = vmatprep.subr.mxu0 0.0
    %172 = vmatpush2.msra.mxu0 0.0
    %173 = vmatprep.subr.mxu0 0.0
    %174 = vmatpush2.msra.mxu0 0.0
    %175 = vmatprep.mubr.f32.mxu0 0.0
    %176 = vmatmul.mubr.f32.gmra.mxu0 %v102
    %v177 = vpop.f32.mrf.mxu0
    %v178 = vadd.f32 %v98, %v177
    %v179 = vpop.f32.mrf.mxu0
    %180 = vmatprep.mubr.f32.mxu0 0.0
    %181 = vmatmul.mubr.f32.gmra.mxu0 %v105
    %v182 = vpop.f32.mrf.mxu0
    %v183 = vadd.f32 %v98, %v182
    %v184 = vpop.f32.mrf.mxu0
    %185 = vdwg.mxu0
    %v186 = vtanh.pop %v178
    %v187 = vtanh.pop %v183
    %v188 = vld [vmem:[%s3 + $0x1] ss:$0 sm:$0xff]
    %v189 = vld [vmem:[#allocation2] sm:$0xff]
    %v190 = vld [vmem:[#allocation2 + $0x8] sm:$0xff]
    %v191 = vld [vmem:[#allocation2 + $0x10] sm:$0xff]
    %v192 = vld [vmem:[#allocation2 + $0x18] sm:$0xff]
    %v193 = vld [vmem:[#allocation2 + $0x20] sm:$0xff]
    %v194 = vld [vmem:[#allocation2 + $0x28] sm:$0xff]
    %v195 = vld [vmem:[#allocation2 + $0x30] sm:$0xff]
    %v196 = vld [vmem:[#allocation2 + $0x38] sm:$0xff]
    %vm197 = vcmask 523264
    %v199 = vsel %vm197, %v186, 0
    %v202 = vsel %vm197, %v187, 0
    %204 = vmatprep.subr.mxu0 0.0
    %205 = vmatpush1.msra.mxu0 0.0
    %206 = vmatprep.subr.mxu0 0.0
    %207 = vmatpush1.msra.mxu0 0.0
    %208 = vmatprep.subr.mxu0 0.0
    %209 = vmatpush1.msra.mxu0 0.0
    %210 = vmatprep.subr.mxu0 0.0
    %211 = vmatpush1.msra.mxu0 0.0
    %212 = vmatprep.subr.mxu0 0.0
    %213 = vmatpush1.msra.mxu0 0.0
    %214 = vmatprep.subr.mxu0 0.0
    %215 = vmatpush1.msra.mxu0 0.0
    %216 = vmatprep.subr.mxu0 0.0
    %217 = vmatpush1.msra.mxu0 0.0
    %218 = vmatprep.subr.mxu0 0.0
    %219 = vmatpush1.msra.mxu0 0.0
    %220 = vmatprep.subr.mxu0 0.0
    %221 = vmatpush1.msra.mxu0 %v196
    %222 = vmatprep.subr.mxu0 0.0
    %223 = vmatpush1.msra.mxu0 %v195
    %224 = vmatprep.subr.mxu0 0.0
    %225 = vmatpush1.msra.mxu0 %v194
    %226 = vmatprep.subr.mxu0 0.0
    %227 = vmatpush1.msra.mxu0 %v193
    %228 = vmatprep.subr.mxu0 0.0
    %229 = vmatpush1.msra.mxu0 %v192
    %230 = vmatprep.subr.mxu0 0.0
    %231 = vmatpush1.msra.mxu0 %v191
    %232 = vmatprep.subr.mxu0 0.0
    %233 = vmatpush1.msra.mxu0 %v190
    %234 = vmatprep.subr.mxu0 0.0
    %235 = vmatpush1.msra.mxu0 %v189
    %236 = vmatprep.subr.mxu0 0.0
    %237 = vmatpush2.msra.mxu0 0.0
    %238 = vmatprep.subr.mxu0 0.0
    %239 = vmatpush2.msra.mxu0 0.0
    %240 = vmatprep.subr.mxu0 0.0
    %241 = vmatpush2.msra.mxu0 0.0
    %242 = vmatprep.subr.mxu0 0.0
    %243 = vmatpush2.msra.mxu0 0.0
    %244 = vmatprep.subr.mxu0 0.0
    %245 = vmatpush2.msra.mxu0 0.0
    %246 = vmatprep.subr.mxu0 0.0
    %247 = vmatpush2.msra.mxu0 0.0
    %248 = vmatprep.subr.mxu0 0.0
    %249 = vmatpush2.msra.mxu0 0.0
    %250 = vmatprep.subr.mxu0 0.0
    %251 = vmatpush2.msra.mxu0 0.0
    %252 = vmatprep.subr.mxu0 0.0
    %253 = vmatpush2.msra.mxu0 0.0
    %254 = vmatprep.subr.mxu0 0.0
    %255 = vmatpush2.msra.mxu0 0.0
    %256 = vmatprep.subr.mxu0 0.0
    %257 = vmatpush2.msra.mxu0 0.0
    %258 = vmatprep.subr.mxu0 0.0
    %259 = vmatpush2.msra.mxu0 0.0
    %260 = vmatprep.subr.mxu0 0.0
    %261 = vmatpush2.msra.mxu0 0.0
    %262 = vmatprep.subr.mxu0 0.0
    %263 = vmatpush2.msra.mxu0 0.0
    %264 = vmatprep.subr.mxu0 0.0
    %265 = vmatpush2.msra.mxu0 0.0
    %266 = vmatprep.subr.mxu0 0.0
    %267 = vmatpush2.msra.mxu0 0.0
    %268 = vmatprep.mubr.f32.mxu0 0.0
    %269 = vmatmul.mubr.f32.gmra.mxu0 %v199
    %v270 = vpop.f32.mrf.mxu0
    %v271 = vadd.f32 %v188, %v270
    %v272 = vpop.f32.mrf.mxu0
    %273 = vmatprep.mubr.f32.mxu0 0.0
    %274 = vmatmul.mubr.f32.gmra.mxu0 %v202
    %v275 = vpop.f32.mrf.mxu0
    %v276 = vadd.f32 %v188, %v275
    %v277 = vpop.f32.mrf.mxu0
    %278 = vdwg.mxu0
    %v279 = vlaneseq
    %v280 = vand.u32 %v279, 127
    %vm281 = vcmp.lt.s32.totalorder %v280, 64
    %v282 = vtanh.pop %v271
    %v283 = vtanh.pop %v276
    %v284 = vmax.f32 %v271, 0.0
    %v285 = vmax.f32 %v276, 0.0
    %v286 = vsel %vm281, %v282, %v284
    %v287 = vsel %vm281, %v283, %v285
    %s288 = scalar_lea.vmem %s3, 2
    %v289 = vld [vmem:[%s288] ss:$8 sm:$0x3]
    %v290 = vld [vmem:[%s6] sm:$0xff]
    %v291 = vld [vmem:[%s6 + $0x8] sm:$0xff]
    %v292 = vld [vmem:[%s6 + $0x10] sm:$0xff]
    %v293 = vld [vmem:[%s6 + $0x18] sm:$0xff]
    %v294 = vld [vmem:[%s6 + $0x20] sm:$0xff]
    %v295 = vld [vmem:[%s6 + $0x28] sm:$0xff]
    %v296 = vld [vmem:[%s6 + $0x30] sm:$0xff]
    %v297 = vld [vmem:[%s6 + $0x38] sm:$0xff]
    %v298 = vld [vmem:[%s6 + $0x40] sm:$0xff]
    %v299 = vld [vmem:[%s6 + $0x48] sm:$0xff]
    %v300 = vld [vmem:[%s6 + $0x50] sm:$0xff]
    %v301 = vld [vmem:[%s6 + $0x58] sm:$0xff]
    %v302 = vld [vmem:[%s6 + $0x60] sm:$0xff]
    %v303 = vld [vmem:[%s6 + $0x68] sm:$0xff]
    %v304 = vld [vmem:[%s6 + $0x70] sm:$0xff]
    %v305 = vld [vmem:[%s6 + $0x78] sm:$0xff]
    %v306 = vld [vmem:[%s6 + $0x80] sm:$0xff]
    %v307 = vld [vmem:[%s6 + $0x88] sm:$0xff]
    %v308 = vld [vmem:[%s6 + $0x90] sm:$0xff]
    %v309 = vld [vmem:[%s6 + $0x98] sm:$0xff]
    %v310 = vld [vmem:[%s6 + $0xa0] sm:$0xff]
    %v311 = vld [vmem:[%s6 + $0xa8] sm:$0xff]
    %v312 = vld [vmem:[%s6 + $0xb0] sm:$0xff]
    %v313 = vld [vmem:[%s6 + $0xb8] sm:$0xff]
    %v314 = vld [vmem:[%s6 + $0xc0] sm:$0xff]
    %v315 = vld [vmem:[%s6 + $0xc8] sm:$0xff]
    %v316 = vld [vmem:[%s6 + $0xd0] sm:$0xff]
    %v317 = vld [vmem:[%s6 + $0xd8] sm:$0xff]
    %v318 = vld [vmem:[%s6 + $0xe0] sm:$0xff]
    %v319 = vld [vmem:[%s6 + $0xe8] sm:$0xff]
    %v320 = vld [vmem:[%s6 + $0xf0] sm:$0xff]
    %v321 = vld [vmem:[%s6 + $0xf8] sm:$0xff]
    %v323 = vlaneseq
    %v324 = vshrl.u32 %v323, 7
    %v325 = vsub.s32 0, %v324
    %v326 = vrot.slane %v289, %v325
    %v327 = vlaneseq
    %v328 = vshrl.u32 %v327, 7
    %v329 = vsub.s32 1, %v328
    %v330 = vrot.slane %v289, %v329
    %333 = vmatprep.subr.mxu0 %v321
    %334 = vmatpush1.msra.mxu0 %v320
    %335 = vmatprep.subr.mxu0 %v319
    %336 = vmatpush1.msra.mxu0 %v318
    %337 = vmatprep.subr.mxu0 %v317
    %338 = vmatpush1.msra.mxu0 %v316
    %339 = vmatprep.subr.mxu0 %v315
    %340 = vmatpush1.msra.mxu0 %v314
    %341 = vmatprep.subr.mxu0 %v313
    %342 = vmatpush1.msra.mxu0 %v312
    %343 = vmatprep.subr.mxu0 %v311
    %344 = vmatpush1.msra.mxu0 %v310
    %345 = vmatprep.subr.mxu0 %v309
    %346 = vmatpush1.msra.mxu0 %v308
    %347 = vmatprep.subr.mxu0 %v307
    %348 = vmatpush1.msra.mxu0 %v306
    %349 = vmatprep.subr.mxu0 %v305
    %350 = vmatpush1.msra.mxu0 %v304
    %351 = vmatprep.subr.mxu0 %v303
    %352 = vmatpush1.msra.mxu0 %v302
    %353 = vmatprep.subr.mxu0 %v301
    %354 = vmatpush1.msra.mxu0 %v300
    %355 = vmatprep.subr.mxu0 %v299
    %356 = vmatpush1.msra.mxu0 %v298
    %357 = vmatprep.subr.mxu0 %v297
    %358 = vmatpush1.msra.mxu0 %v296
    %359 = vmatprep.subr.mxu0 %v295
    %360 = vmatpush1.msra.mxu0 %v294
    %361 = vmatprep.subr.mxu0 %v293
    %362 = vmatpush1.msra.mxu0 %v292
    %363 = vmatprep.subr.mxu0 %v291
    %364 = vmatpush1.msra.mxu0 %v290
    %365 = vmatprep.subr.mxu0 0.0
    %366 = vmatpush2.msra.mxu0 0.0
    %367 = vmatprep.subr.mxu0 0.0
    %368 = vmatpush2.msra.mxu0 0.0
    %369 = vmatprep.subr.mxu0 0.0
    %370 = vmatpush2.msra.mxu0 0.0
    %371 = vmatprep.subr.mxu0 0.0
    %372 = vmatpush2.msra.mxu0 0.0
    %373 = vmatprep.subr.mxu0 0.0
    %374 = vmatpush2.msra.mxu0 0.0
    %375 = vmatprep.subr.mxu0 0.0
    %376 = vmatpush2.msra.mxu0 0.0
    %377 = vmatprep.subr.mxu0 0.0
    %378 = vmatpush2.msra.mxu0 0.0
    %379 = vmatprep.subr.mxu0 0.0
    %380 = vmatpush2.msra.mxu0 0.0
    %381 = vmatprep.subr.mxu0 0.0
    %382 = vmatpush2.msra.mxu0 0.0
    %383 = vmatprep.subr.mxu0 0.0
    %384 = vmatpush2.msra.mxu0 0.0
    %385 = vmatprep.subr.mxu0 0.0
    %386 = vmatpush2.msra.mxu0 0.0
    %387 = vmatprep.subr.mxu0 0.0
    %388 = vmatpush2.msra.mxu0 0.0
    %389 = vmatprep.subr.mxu0 0.0
    %390 = vmatpush2.msra.mxu0 0.0
    %391 = vmatprep.subr.mxu0 0.0
    %392 = vmatpush2.msra.mxu0 0.0
    %393 = vmatprep.subr.mxu0 0.0
    %394 = vmatpush2.msra.mxu0 0.0
    %395 = vmatprep.subr.mxu0 0.0
    %396 = vmatpush2.msra.mxu0 0.0
    %397 = vmatprep.mubr.f32.mxu0 0.0
    %398 = vmatmul.mubr.f32.gmra.mxu0 %v286
    %v399 = vpop.f32.mrf.mxu0
    %v400 = vadd.f32 %v326, %v399
    %v401 = vpop.f32.mrf.mxu0
    %v402 = vadd.f32 %v330, %v401
    %403 = vmatprep.mubr.f32.mxu0 0.0
    %404 = vmatmul.mubr.f32.gmra.mxu0 %v287
    %v405 = vpop.f32.mrf.mxu0
    %v406 = vadd.f32 %v326, %v405
    %v407 = vpop.f32.mrf.mxu0
    %v408 = vadd.f32 %v330, %v407
    %409 = vdwg.mxu0
    %v410 = vmax.f32 %v400, 0.0
    %v411 = vmax.f32 %v402, 0.0
    %v412 = vmax.f32 %v406, 0.0
    %v413 = vmax.f32 %v408, 0.0
    %s414 = scalar_lea.vmem %s3, 3
    %v415 = vld [vmem:[%s414] ss:$8 sm:$0xf]
    %v416 = vld [vmem:[#allocation4] sm:$0xff]
    %v417 = vld [vmem:[#allocation4 + $0x8] sm:$0xff]
    %v418 = vld [vmem:[#allocation4 + $0x10] sm:$0xff]
    %v419 = vld [vmem:[#allocation4 + $0x18] sm:$0xff]
    %v420 = vld [vmem:[#allocation4 + $0x20] sm:$0xff]
    %v421 = vld [vmem:[#allocation4 + $0x28] sm:$0xff]
    %v422 = vld [vmem:[#allocation4 + $0x30] sm:$0xff]
    %v423 = vld [vmem:[#allocation4 + $0x38] sm:$0xff]
    %v424 = vld [vmem:[#allocation4 + $0x40] sm:$0xff]
    %v425 = vld [vmem:[#allocation4 + $0x48] sm:$0xff]
    %v426 = vld [vmem:[#allocation4 + $0x50] sm:$0xff]
    %v427 = vld [vmem:[#allocation4 + $0x58] sm:$0xff]
    %v428 = vld [vmem:[#allocation4 + $0x60] sm:$0xff]
    %v429 = vld [vmem:[#allocation4 + $0x68] sm:$0xff]
    %v430 = vld [vmem:[#allocation4 + $0x70] sm:$0xff]
    %v431 = vld [vmem:[#allocation4 + $0x78] sm:$0xff]
    %v432 = vld [vmem:[#allocation4 + $0x80] sm:$0xff]
    %v433 = vld [vmem:[#allocation4 + $0x88] sm:$0xff]
    %v434 = vld [vmem:[#allocation4 + $0x90] sm:$0xff]
    %v435 = vld [vmem:[#allocation4 + $0x98] sm:$0xff]
    %v436 = vld [vmem:[#allocation4 + $0xa0] sm:$0xff]
    %v437 = vld [vmem:[#allocation4 + $0xa8] sm:$0xff]
    %v438 = vld [vmem:[#allocation4 + $0xb0] sm:$0xff]
    %v439 = vld [vmem:[#allocation4 + $0xb8] sm:$0xff]
    %v440 = vld [vmem:[#allocation4 + $0xc0] sm:$0xff]
    %v441 = vld [vmem:[#allocation4 + $0xc8] sm:$0xff]
    %v442 = vld [vmem:[#allocation4 + $0xd0] sm:$0xff]
    %v443 = vld [vmem:[#allocation4 + $0xd8] sm:$0xff]
    %v444 = vld [vmem:[#allocation4 + $0xe0] sm:$0xff]
    %v445 = vld [vmem:[#allocation4 + $0xe8] sm:$0xff]
    %v446 = vld [vmem:[#allocation4 + $0xf0] sm:$0xff]
    %v447 = vld [vmem:[#allocation4 + $0xf8] sm:$0xff]
    %v448 = vld [vmem:[#allocation4 + $0x100] sm:$0xff]
    %v449 = vld [vmem:[#allocation4 + $0x108] sm:$0xff]
    %v450 = vld [vmem:[#allocation4 + $0x110] sm:$0xff]
    %v451 = vld [vmem:[#allocation4 + $0x118] sm:$0xff]
    %v452 = vld [vmem:[#allocation4 + $0x120] sm:$0xff]
    %v453 = vld [vmem:[#allocation4 + $0x128] sm:$0xff]
    %v454 = vld [vmem:[#allocation4 + $0x130] sm:$0xff]
    %v455 = vld [vmem:[#allocation4 + $0x138] sm:$0xff]
    %v456 = vld [vmem:[#allocation4 + $0x140] sm:$0xff]
    %v457 = vld [vmem:[#allocation4 + $0x148] sm:$0xff]
    %v458 = vld [vmem:[#allocation4 + $0x150] sm:$0xff]
    %v459 = vld [vmem:[#allocation4 + $0x158] sm:$0xff]
    %v460 = vld [vmem:[#allocation4 + $0x160] sm:$0xff]
    %v461 = vld [vmem:[#allocation4 + $0x168] sm:$0xff]
    %v462 = vld [vmem:[#allocation4 + $0x170] sm:$0xff]
    %v463 = vld [vmem:[#allocation4 + $0x178] sm:$0xff]
    %v464 = vld [vmem:[#allocation4 + $0x180] sm:$0xff]
    %v465 = vld [vmem:[#allocation4 + $0x188] sm:$0xff]
    %v466 = vld [vmem:[#allocation4 + $0x190] sm:$0xff]
    %v467 = vld [vmem:[#allocation4 + $0x198] sm:$0xff]
    %v468 = vld [vmem:[#allocation4 + $0x1a0] sm:$0xff]
    %v469 = vld [vmem:[#allocation4 + $0x1a8] sm:$0xff]
    %v470 = vld [vmem:[#allocation4 + $0x1b0] sm:$0xff]
    %v471 = vld [vmem:[#allocation4 + $0x1b8] sm:$0xff]
    %v472 = vld [vmem:[#allocation4 + $0x1c0] sm:$0xff]
    %v473 = vld [vmem:[#allocation4 + $0x1c8] sm:$0xff]
    %v474 = vld [vmem:[#allocation4 + $0x1d0] sm:$0xff]
    %v475 = vld [vmem:[#allocation4 + $0x1d8] sm:$0xff]
    %v476 = vld [vmem:[#allocation4 + $0x1e0] sm:$0xff]
    %v477 = vld [vmem:[#allocation4 + $0x1e8] sm:$0xff]
    %v478 = vld [vmem:[#allocation4 + $0x1f0] sm:$0xff]
    %v479 = vld [vmem:[#allocation4 + $0x1f8] sm:$0xff]
    %v480 = vld [vmem:[#allocation4 + $0x200] sm:$0xff]
    %v481 = vld [vmem:[#allocation4 + $0x208] sm:$0xff]
    %v482 = vld [vmem:[#allocation4 + $0x210] sm:$0xff]
    %v483 = vld [vmem:[#allocation4 + $0x218] sm:$0xff]
    %v484 = vld [vmem:[#allocation4 + $0x220] sm:$0xff]
    %v485 = vld [vmem:[#allocation4 + $0x228] sm:$0xff]
    %v486 = vld [vmem:[#allocation4 + $0x230] sm:$0xff]
    %v487 = vld [vmem:[#allocation4 + $0x238] sm:$0xff]
    %v488 = vld [vmem:[#allocation4 + $0x240] sm:$0xff]
    %v489 = vld [vmem:[#allocation4 + $0x248] sm:$0xff]
    %v490 = vld [vmem:[#allocation4 + $0x250] sm:$0xff]
    %v491 = vld [vmem:[#allocation4 + $0x258] sm:$0xff]
    %v492 = vld [vmem:[#allocation4 + $0x260] sm:$0xff]
    %v493 = vld [vmem:[#allocation4 + $0x268] sm:$0xff]
    %v494 = vld [vmem:[#allocation4 + $0x270] sm:$0xff]
    %v495 = vld [vmem:[#allocation4 + $0x278] sm:$0xff]
    %v496 = vld [vmem:[#allocation4 + $0x280] sm:$0xff]
    %v497 = vld [vmem:[#allocation4 + $0x288] sm:$0xff]
    %v498 = vld [vmem:[#allocation4 + $0x290] sm:$0xff]
    %v499 = vld [vmem:[#allocation4 + $0x298] sm:$0xff]
    %v500 = vld [vmem:[#allocation4 + $0x2a0] sm:$0xff]
    %v501 = vld [vmem:[#allocation4 + $0x2a8] sm:$0xff]
    %v502 = vld [vmem:[#allocation4 + $0x2b0] sm:$0xff]
    %v503 = vld [vmem:[#allocation4 + $0x2b8] sm:$0xff]
    %v504 = vld [vmem:[#allocation4 + $0x2c0] sm:$0xff]
    %v505 = vld [vmem:[#allocation4 + $0x2c8] sm:$0xff]
    %v506 = vld [vmem:[#allocation4 + $0x2d0] sm:$0xff]
    %v507 = vld [vmem:[#allocation4 + $0x2d8] sm:$0xff]
    %v508 = vld [vmem:[#allocation4 + $0x2e0] sm:$0xff]
    %v509 = vld [vmem:[#allocation4 + $0x2e8] sm:$0xff]
    %v510 = vld [vmem:[#allocation4 + $0x2f0] sm:$0xff]
    %v511 = vld [vmem:[#allocation4 + $0x2f8] sm:$0xff]
    %v512 = vld [vmem:[#allocation4 + $0x300] sm:$0xff]
    %v513 = vld [vmem:[#allocation4 + $0x308] sm:$0xff]
    %v514 = vld [vmem:[#allocation4 + $0x310] sm:$0xff]
    %v515 = vld [vmem:[#allocation4 + $0x318] sm:$0xff]
    %v516 = vld [vmem:[#allocation4 + $0x320] sm:$0xff]
    %v517 = vld [vmem:[#allocation4 + $0x328] sm:$0xff]
    %v518 = vld [vmem:[#allocation4 + $0x330] sm:$0xff]
    %v519 = vld [vmem:[#allocation4 + $0x338] sm:$0xff]
    %v520 = vld [vmem:[#allocation4 + $0x340] sm:$0xff]
    %v521 = vld [vmem:[#allocation4 + $0x348] sm:$0xff]
    %v522 = vld [vmem:[#allocation4 + $0x350] sm:$0xff]
    %v523 = vld [vmem:[#allocation4 + $0x358] sm:$0xff]
    %v524 = vld [vmem:[#allocation4 + $0x360] sm:$0xff]
    %v525 = vld [vmem:[#allocation4 + $0x368] sm:$0xff]
    %v526 = vld [vmem:[#allocation4 + $0x370] sm:$0xff]
    %v527 = vld [vmem:[#allocation4 + $0x378] sm:$0xff]
    %v528 = vld [vmem:[#allocation4 + $0x380] sm:$0xff]
    %v529 = vld [vmem:[#allocation4 + $0x388] sm:$0xff]
    %v530 = vld [vmem:[#allocation4 + $0x390] sm:$0xff]
    %v531 = vld [vmem:[#allocation4 + $0x398] sm:$0xff]
    %v532 = vld [vmem:[#allocation4 + $0x3a0] sm:$0xff]
    %v533 = vld [vmem:[#allocation4 + $0x3a8] sm:$0xff]
    %v534 = vld [vmem:[#allocation4 + $0x3b0] sm:$0xff]
    %v535 = vld [vmem:[#allocation4 + $0x3b8] sm:$0xff]
    %v536 = vld [vmem:[#allocation4 + $0x3c0] sm:$0xff]
    %v537 = vld [vmem:[#allocation4 + $0x3c8] sm:$0xff]
    %v538 = vld [vmem:[#allocation4 + $0x3d0] sm:$0xff]
    %v539 = vld [vmem:[#allocation4 + $0x3d8] sm:$0xff]
    %v540 = vld [vmem:[#allocation4 + $0x3e0] sm:$0xff]
    %v541 = vld [vmem:[#allocation4 + $0x3e8] sm:$0xff]
    %v542 = vld [vmem:[#allocation4 + $0x3f0] sm:$0xff]
    %v543 = vld [vmem:[#allocation4 + $0x3f8] sm:$0xff]
    %v545 = vlaneseq
    %v546 = vshrl.u32 %v545, 7
    %v547 = vsub.s32 0, %v546
    %v548 = vrot.slane %v415, %v547
    %v549 = vlaneseq
    %v550 = vshrl.u32 %v549, 7
    %v551 = vsub.s32 1, %v550
    %v552 = vrot.slane %v415, %v551
    %v553 = vlaneseq
    %v554 = vshrl.u32 %v553, 7
    %v555 = vsub.s32 2, %v554
    %v556 = vrot.slane %v415, %v555
    %v557 = vlaneseq
    %v558 = vshrl.u32 %v557, 7
    %v559 = vsub.s32 3, %v558
    %v560 = vrot.slane %v415, %v559
    %565 = vmatprep.subr.mxu0 %v477
    %566 = vmatpush1.msra.mxu0 %v476
    %567 = vmatprep.subr.mxu0 %v473
    %568 = vmatpush1.msra.mxu0 %v472
    %569 = vmatprep.subr.mxu0 %v469
    %570 = vmatpush1.msra.mxu0 %v468
    %571 = vmatprep.subr.mxu0 %v465
    %572 = vmatpush1.msra.mxu0 %v464
    %573 = vmatprep.subr.mxu0 %v461
    %574 = vmatpush1.msra.mxu0 %v460
    %575 = vmatprep.subr.mxu0 %v457
    %576 = vmatpush1.msra.mxu0 %v456
    %577 = vmatprep.subr.mxu0 %v453
    %578 = vmatpush1.msra.mxu0 %v452
    %579 = vmatprep.subr.mxu0 %v449
    %580 = vmatpush1.msra.mxu0 %v448
    %581 = vmatprep.subr.mxu0 %v445
    %582 = vmatpush1.msra.mxu0 %v444
    %583 = vmatprep.subr.mxu0 %v441
    %584 = vmatpush1.msra.mxu0 %v440
    %585 = vmatprep.subr.mxu0 %v437
    %586 = vmatpush1.msra.mxu0 %v436
    %587 = vmatprep.subr.mxu0 %v433
    %588 = vmatpush1.msra.mxu0 %v432
    %589 = vmatprep.subr.mxu0 %v429
    %590 = vmatpush1.msra.mxu0 %v428
    %591 = vmatprep.subr.mxu0 %v425
    %592 = vmatpush1.msra.mxu0 %v424
    %593 = vmatprep.subr.mxu0 %v421
    %594 = vmatpush1.msra.mxu0 %v420
    %595 = vmatprep.subr.mxu0 %v417
    %596 = vmatpush1.msra.mxu0 %v416
    %597 = vmatprep.subr.mxu0 %v541
    %598 = vmatpush2.msra.mxu0 %v540
    %599 = vmatprep.subr.mxu0 %v537
    %600 = vmatpush2.msra.mxu0 %v536
    %601 = vmatprep.subr.mxu0 %v533
    %602 = vmatpush2.msra.mxu0 %v532
    %603 = vmatprep.subr.mxu0 %v529
    %604 = vmatpush2.msra.mxu0 %v528
    %605 = vmatprep.subr.mxu0 %v525
    %606 = vmatpush2.msra.mxu0 %v524
    %607 = vmatprep.subr.mxu0 %v521
    %608 = vmatpush2.msra.mxu0 %v520
    %609 = vmatprep.subr.mxu0 %v517
    %610 = vmatpush2.msra.mxu0 %v516
    %611 = vmatprep.subr.mxu0 %v513
    %612 = vmatpush2.msra.mxu0 %v512
    %613 = vmatprep.subr.mxu0 %v509
    %614 = vmatpush2.msra.mxu0 %v508
    %615 = vmatprep.subr.mxu0 %v505
    %616 = vmatpush2.msra.mxu0 %v504
    %617 = vmatprep.subr.mxu0 %v501
    %618 = vmatpush2.msra.mxu0 %v500
    %619 = vmatprep.subr.mxu0 %v497
    %620 = vmatpush2.msra.mxu0 %v496
    %621 = vmatprep.subr.mxu0 %v493
    %622 = vmatpush2.msra.mxu0 %v492
    %623 = vmatprep.subr.mxu0 %v489
    %624 = vmatpush2.msra.mxu0 %v488
    %625 = vmatprep.subr.mxu0 %v485
    %626 = vmatpush2.msra.mxu0 %v484
    %627 = vmatprep.subr.mxu0 %v481
    %628 = vmatpush2.msra.mxu0 %v480
    %629 = vmatprep.mubr.f32.mxu0 %v411
    %630 = vmatmul.mubr.f32.gmra.mxu0 %v410
    %v631 = vpop.f32.mrf.mxu0
    %v632 = vadd.f32 %v548, %v631
    %v633 = vpop.f32.mrf.mxu0
    %v634 = vadd.f32 %v552, %v633
    %635 = vmatprep.mubr.f32.mxu0 %v413
    %636 = vmatmul.mubr.f32.gmra.mxu0 %v412
    %v637 = vpop.f32.mrf.mxu0
    %v638 = vadd.f32 %v548, %v637
    %v639 = vpop.f32.mrf.mxu0
    %v640 = vadd.f32 %v552, %v639
    %641 = vdwg.mxu0
    %642 = vmatprep.subr.mxu0 %v479
    %643 = vmatpush1.msra.mxu0 %v478
    %644 = vmatprep.subr.mxu0 %v475
    %645 = vmatpush1.msra.mxu0 %v474
    %646 = vmatprep.subr.mxu0 %v471
    %647 = vmatpush1.msra.mxu0 %v470
    %648 = vmatprep.subr.mxu0 %v467
    %649 = vmatpush1.msra.mxu0 %v466
    %650 = vmatprep.subr.mxu0 %v463
    %651 = vmatpush1.msra.mxu0 %v462
    %652 = vmatprep.subr.mxu0 %v459
    %653 = vmatpush1.msra.mxu0 %v458
    %654 = vmatprep.subr.mxu0 %v455
    %655 = vmatpush1.msra.mxu0 %v454
    %656 = vmatprep.subr.mxu0 %v451
    %657 = vmatpush1.msra.mxu0 %v450
    %658 = vmatprep.subr.mxu0 %v447
    %659 = vmatpush1.msra.mxu0 %v446
    %660 = vmatprep.subr.mxu0 %v443
    %661 = vmatpush1.msra.mxu0 %v442
    %662 = vmatprep.subr.mxu0 %v439
    %663 = vmatpush1.msra.mxu0 %v438
    %664 = vmatprep.subr.mxu0 %v435
    %665 = vmatpush1.msra.mxu0 %v434
    %666 = vmatprep.subr.mxu0 %v431
    %667 = vmatpush1.msra.mxu0 %v430
    %668 = vmatprep.subr.mxu0 %v427
    %669 = vmatpush1.msra.mxu0 %v426
    %670 = vmatprep.subr.mxu0 %v423
    %671 = vmatpush1.msra.mxu0 %v422
    %672 = vmatprep.subr.mxu0 %v419
    %673 = vmatpush1.msra.mxu0 %v418
    %674 = vmatprep.subr.mxu0 %v543
    %675 = vmatpush2.msra.mxu0 %v542
    %676 = vmatprep.subr.mxu0 %v539
    %677 = vmatpush2.msra.mxu0 %v538
    %678 = vmatprep.subr.mxu0 %v535
    %679 = vmatpush2.msra.mxu0 %v534
    %680 = vmatprep.subr.mxu0 %v531
    %681 = vmatpush2.msra.mxu0 %v530
    %682 = vmatprep.subr.mxu0 %v527
    %683 = vmatpush2.msra.mxu0 %v526
    %684 = vmatprep.subr.mxu0 %v523
    %685 = vmatpush2.msra.mxu0 %v522
    %686 = vmatprep.subr.mxu0 %v519
    %687 = vmatpush2.msra.mxu0 %v518
    %688 = vmatprep.subr.mxu0 %v515
    %689 = vmatpush2.msra.mxu0 %v514
    %690 = vmatprep.subr.mxu0 %v511
    %691 = vmatpush2.msra.mxu0 %v510
    %692 = vmatprep.subr.mxu0 %v507
    %693 = vmatpush2.msra.mxu0 %v506
    %694 = vmatprep.subr.mxu0 %v503
    %695 = vmatpush2.msra.mxu0 %v502
    %696 = vmatprep.subr.mxu0 %v499
    %697 = vmatpush2.msra.mxu0 %v498
    %698 = vmatprep.subr.mxu0 %v495
    %699 = vmatpush2.msra.mxu0 %v494
    %700 = vmatprep.subr.mxu0 %v491
    %701 = vmatpush2.msra.mxu0 %v490
    %702 = vmatprep.subr.mxu0 %v487
    %703 = vmatpush2.msra.mxu0 %v486
    %704 = vmatprep.subr.mxu0 %v483
    %705 = vmatpush2.msra.mxu0 %v482
    %706 = vmatprep.mubr.f32.mxu0 %v411
    %707 = vmatmul.mubr.f32.gmra.mxu0 %v410
    %v708 = vpop.f32.mrf.mxu0
    %v709 = vadd.f32 %v556, %v708
    %v710 = vpop.f32.mrf.mxu0
    %v711 = vadd.f32 %v560, %v710
    %712 = vmatprep.mubr.f32.mxu0 %v413
    %713 = vmatmul.mubr.f32.gmra.mxu0 %v412
    %v714 = vpop.f32.mrf.mxu0
    %v715 = vadd.f32 %v556, %v714
    %v716 = vpop.f32.mrf.mxu0
    %v717 = vadd.f32 %v560, %v716
    %718 = vdwg.mxu0
    %v719 = vtanh.pop %v632
    %v720 = vtanh.pop %v634
    %v721 = vtanh.pop %v709
    %v722 = vtanh.pop %v711
    %v723 = vtanh.pop %v638
    %v724 = vtanh.pop %v640
    %v725 = vtanh.pop %v715
    %v726 = vtanh.pop %v717
    %s727 = scalar_lea.vmem %s3, 4
    %v728 = vld [vmem:[%s727] ss:$8 sm:$0x3]
    %v729 = vld [vmem:[#allocation6] sm:$0xff]
    %v730 = vld [vmem:[#allocation6 + $0x8] sm:$0xff]
    %v731 = vld [vmem:[#allocation6 + $0x10] sm:$0xff]
    %v732 = vld [vmem:[#allocation6 + $0x18] sm:$0xff]
    %v733 = vld [vmem:[#allocation6 + $0x20] sm:$0xff]
    %v734 = vld [vmem:[#allocation6 + $0x28] sm:$0xff]
    %v735 = vld [vmem:[#allocation6 + $0x30] sm:$0xff]
    %v736 = vld [vmem:[#allocation6 + $0x38] sm:$0xff]
    %v737 = vld [vmem:[#allocation6 + $0x40] sm:$0xff]
    %v738 = vld [vmem:[#allocation6 + $0x48] sm:$0xff]
    %v739 = vld [vmem:[#allocation6 + $0x50] sm:$0xff]
    %v740 = vld [vmem:[#allocation6 + $0x58] sm:$0xff]
    %v741 = vld [vmem:[#allocation6 + $0x60] sm:$0xff]
    %v742 = vld [vmem:[#allocation6 + $0x68] sm:$0xff]
    %v743 = vld [vmem:[#allocation6 + $0x70] sm:$0xff]
    %v744 = vld [vmem:[#allocation6 + $0x78] sm:$0xff]
    %v745 = vld [vmem:[#allocation6 + $0x80] sm:$0xff]
    %v746 = vld [vmem:[#allocation6 + $0x88] sm:$0xff]
    %v747 = vld [vmem:[#allocation6 + $0x90] sm:$0xff]
    %v748 = vld [vmem:[#allocation6 + $0x98] sm:$0xff]
    %v749 = vld [vmem:[#allocation6 + $0xa0] sm:$0xff]
    %v750 = vld [vmem:[#allocation6 + $0xa8] sm:$0xff]
    %v751 = vld [vmem:[#allocation6 + $0xb0] sm:$0xff]
    %v752 = vld [vmem:[#allocation6 + $0xb8] sm:$0xff]
    %v753 = vld [vmem:[#allocation6 + $0xc0] sm:$0xff]
    %v754 = vld [vmem:[#allocation6 + $0xc8] sm:$0xff]
    %v755 = vld [vmem:[#allocation6 + $0xd0] sm:$0xff]
    %v756 = vld [vmem:[#allocation6 + $0xd8] sm:$0xff]
    %v757 = vld [vmem:[#allocation6 + $0xe0] sm:$0xff]
    %v758 = vld [vmem:[#allocation6 + $0xe8] sm:$0xff]
    %v759 = vld [vmem:[#allocation6 + $0xf0] sm:$0xff]
    %v760 = vld [vmem:[#allocation6 + $0xf8] sm:$0xff]
    %v761 = vld [vmem:[#allocation6 + $0x100] sm:$0xff]
    %v762 = vld [vmem:[#allocation6 + $0x108] sm:$0xff]
    %v763 = vld [vmem:[#allocation6 + $0x110] sm:$0xff]
    %v764 = vld [vmem:[#allocation6 + $0x118] sm:$0xff]
    %v765 = vld [vmem:[#allocation6 + $0x120] sm:$0xff]
    %v766 = vld [vmem:[#allocation6 + $0x128] sm:$0xff]
    %v767 = vld [vmem:[#allocation6 + $0x130] sm:$0xff]
    %v768 = vld [vmem:[#allocation6 + $0x138] sm:$0xff]
    %v769 = vld [vmem:[#allocation6 + $0x140] sm:$0xff]
    %v770 = vld [vmem:[#allocation6 + $0x148] sm:$0xff]
    %v771 = vld [vmem:[#allocation6 + $0x150] sm:$0xff]
    %v772 = vld [vmem:[#allocation6 + $0x158] sm:$0xff]
    %v773 = vld [vmem:[#allocation6 + $0x160] sm:$0xff]
    %v774 = vld [vmem:[#allocation6 + $0x168] sm:$0xff]
    %v775 = vld [vmem:[#allocation6 + $0x170] sm:$0xff]
    %v776 = vld [vmem:[#allocation6 + $0x178] sm:$0xff]
    %v777 = vld [vmem:[#allocation6 + $0x180] sm:$0xff]
    %v778 = vld [vmem:[#allocation6 + $0x188] sm:$0xff]
    %v779 = vld [vmem:[#allocation6 + $0x190] sm:$0xff]
    %v780 = vld [vmem:[#allocation6 + $0x198] sm:$0xff]
    %v781 = vld [vmem:[#allocation6 + $0x1a0] sm:$0xff]
    %v782 = vld [vmem:[#allocation6 + $0x1a8] sm:$0xff]
    %v783 = vld [vmem:[#allocation6 + $0x1b0] sm:$0xff]
    %v784 = vld [vmem:[#allocation6 + $0x1b8] sm:$0xff]
    %v785 = vld [vmem:[#allocation6 + $0x1c0] sm:$0xff]
    %v786 = vld [vmem:[#allocation6 + $0x1c8] sm:$0xff]
    %v787 = vld [vmem:[#allocation6 + $0x1d0] sm:$0xff]
    %v788 = vld [vmem:[#allocation6 + $0x1d8] sm:$0xff]
    %v789 = vld [vmem:[#allocation6 + $0x1e0] sm:$0xff]
    %v790 = vld [vmem:[#allocation6 + $0x1e8] sm:$0xff]
    %v791 = vld [vmem:[#allocation6 + $0x1f0] sm:$0xff]
    %v792 = vld [vmem:[#allocation6 + $0x1f8] sm:$0xff]
    %v793 = vld [vmem:[#allocation6 + $0x200] sm:$0xff]
    %v794 = vld [vmem:[#allocation6 + $0x208] sm:$0xff]
    %v795 = vld [vmem:[#allocation6 + $0x210] sm:$0xff]
    %v796 = vld [vmem:[#allocation6 + $0x218] sm:$0xff]
    %v797 = vld [vmem:[#allocation6 + $0x220] sm:$0xff]
    %v798 = vld [vmem:[#allocation6 + $0x228] sm:$0xff]
    %v799 = vld [vmem:[#allocation6 + $0x230] sm:$0xff]
    %v800 = vld [vmem:[#allocation6 + $0x238] sm:$0xff]
    %v801 = vld [vmem:[#allocation6 + $0x240] sm:$0xff]
    %v802 = vld [vmem:[#allocation6 + $0x248] sm:$0xff]
    %v803 = vld [vmem:[#allocation6 + $0x250] sm:$0xff]
    %v804 = vld [vmem:[#allocation6 + $0x258] sm:$0xff]
    %v805 = vld [vmem:[#allocation6 + $0x260] sm:$0xff]
    %v806 = vld [vmem:[#allocation6 + $0x268] sm:$0xff]
    %v807 = vld [vmem:[#allocation6 + $0x270] sm:$0xff]
    %v808 = vld [vmem:[#allocation6 + $0x278] sm:$0xff]
    %v809 = vld [vmem:[#allocation6 + $0x280] sm:$0xff]
    %v810 = vld [vmem:[#allocation6 + $0x288] sm:$0xff]
    %v811 = vld [vmem:[#allocation6 + $0x290] sm:$0xff]
    %v812 = vld [vmem:[#allocation6 + $0x298] sm:$0xff]
    %v813 = vld [vmem:[#allocation6 + $0x2a0] sm:$0xff]
    %v814 = vld [vmem:[#allocation6 + $0x2a8] sm:$0xff]
    %v815 = vld [vmem:[#allocation6 + $0x2b0] sm:$0xff]
    %v816 = vld [vmem:[#allocation6 + $0x2b8] sm:$0xff]
    %v817 = vld [vmem:[#allocation6 + $0x2c0] sm:$0xff]
    %v818 = vld [vmem:[#allocation6 + $0x2c8] sm:$0xff]
    %v819 = vld [vmem:[#allocation6 + $0x2d0] sm:$0xff]
    %v820 = vld [vmem:[#allocation6 + $0x2d8] sm:$0xff]
    %v821 = vld [vmem:[#allocation6 + $0x2e0] sm:$0xff]
    %v822 = vld [vmem:[#allocation6 + $0x2e8] sm:$0xff]
    %v823 = vld [vmem:[#allocation6 + $0x2f0] sm:$0xff]
    %v824 = vld [vmem:[#allocation6 + $0x2f8] sm:$0xff]
    %v825 = vld [vmem:[#allocation6 + $0x300] sm:$0xff]
    %v826 = vld [vmem:[#allocation6 + $0x308] sm:$0xff]
    %v827 = vld [vmem:[#allocation6 + $0x310] sm:$0xff]
    %v828 = vld [vmem:[#allocation6 + $0x318] sm:$0xff]
    %v829 = vld [vmem:[#allocation6 + $0x320] sm:$0xff]
    %v830 = vld [vmem:[#allocation6 + $0x328] sm:$0xff]
    %v831 = vld [vmem:[#allocation6 + $0x330] sm:$0xff]
    %v832 = vld [vmem:[#allocation6 + $0x338] sm:$0xff]
    %v833 = vld [vmem:[#allocation6 + $0x340] sm:$0xff]
    %v834 = vld [vmem:[#allocation6 + $0x348] sm:$0xff]
    %v835 = vld [vmem:[#allocation6 + $0x350] sm:$0xff]
    %v836 = vld [vmem:[#allocation6 + $0x358] sm:$0xff]
    %v837 = vld [vmem:[#allocation6 + $0x360] sm:$0xff]
    %v838 = vld [vmem:[#allocation6 + $0x368] sm:$0xff]
    %v839 = vld [vmem:[#allocation6 + $0x370] sm:$0xff]
    %v840 = vld [vmem:[#allocation6 + $0x378] sm:$0xff]
    %v841 = vld [vmem:[#allocation6 + $0x380] sm:$0xff]
    %v842 = vld [vmem:[#allocation6 + $0x388] sm:$0xff]
    %v843 = vld [vmem:[#allocation6 + $0x390] sm:$0xff]
    %v844 = vld [vmem:[#allocation6 + $0x398] sm:$0xff]
    %v845 = vld [vmem:[#allocation6 + $0x3a0] sm:$0xff]
    %v846 = vld [vmem:[#allocation6 + $0x3a8] sm:$0xff]
    %v847 = vld [vmem:[#allocation6 + $0x3b0] sm:$0xff]
    %v848 = vld [vmem:[#allocation6 + $0x3b8] sm:$0xff]
    %v849 = vld [vmem:[#allocation6 + $0x3c0] sm:$0xff]
    %v850 = vld [vmem:[#allocation6 + $0x3c8] sm:$0xff]
    %v851 = vld [vmem:[#allocation6 + $0x3d0] sm:$0xff]
    %v852 = vld [vmem:[#allocation6 + $0x3d8] sm:$0xff]
    %v853 = vld [vmem:[#allocation6 + $0x3e0] sm:$0xff]
    %v854 = vld [vmem:[#allocation6 + $0x3e8] sm:$0xff]
    %v855 = vld [vmem:[#allocation6 + $0x3f0] sm:$0xff]
    %v856 = vld [vmem:[#allocation6 + $0x3f8] sm:$0xff]
    %v858 = vlaneseq
    %v859 = vshrl.u32 %v858, 7
    %v860 = vsub.s32 0, %v859
    %v861 = vrot.slane %v728, %v860
    %v862 = vlaneseq
    %v863 = vshrl.u32 %v862, 7
    %v864 = vsub.s32 1, %v863
    %v865 = vrot.slane %v728, %v864
    %868 = vmatprep.subr.mxu0 %v760
    %869 = vmatpush1.msra.mxu0 %v759
    %870 = vmatprep.subr.mxu0 %v758
    %871 = vmatpush1.msra.mxu0 %v757
    %872 = vmatprep.subr.mxu0 %v756
    %873 = vmatpush1.msra.mxu0 %v755
    %874 = vmatprep.subr.mxu0 %v754
    %875 = vmatpush1.msra.mxu0 %v753
    %876 = vmatprep.subr.mxu0 %v752
    %877 = vmatpush1.msra.mxu0 %v751
    %878 = vmatprep.subr.mxu0 %v750
    %879 = vmatpush1.msra.mxu0 %v749
    %880 = vmatprep.subr.mxu0 %v748
    %881 = vmatpush1.msra.mxu0 %v747
    %882 = vmatprep.subr.mxu0 %v746
    %883 = vmatpush1.msra.mxu0 %v745
    %884 = vmatprep.subr.mxu0 %v744
    %885 = vmatpush1.msra.mxu0 %v743
    %886 = vmatprep.subr.mxu0 %v742
    %887 = vmatpush1.msra.mxu0 %v741
    %888 = vmatprep.subr.mxu0 %v740
    %889 = vmatpush1.msra.mxu0 %v739
    %890 = vmatprep.subr.mxu0 %v738
    %891 = vmatpush1.msra.mxu0 %v737
    %892 = vmatprep.subr.mxu0 %v736
    %893 = vmatpush1.msra.mxu0 %v735
    %894 = vmatprep.subr.mxu0 %v734
    %895 = vmatpush1.msra.mxu0 %v733
    %896 = vmatprep.subr.mxu0 %v732
    %897 = vmatpush1.msra.mxu0 %v731
    %898 = vmatprep.subr.mxu0 %v730
    %899 = vmatpush1.msra.mxu0 %v729
    %900 = vmatprep.subr.mxu0 %v792
    %901 = vmatpush2.msra.mxu0 %v791
    %902 = vmatprep.subr.mxu0 %v790
    %903 = vmatpush2.msra.mxu0 %v789
    %904 = vmatprep.subr.mxu0 %v788
    %905 = vmatpush2.msra.mxu0 %v787
    %906 = vmatprep.subr.mxu0 %v786
    %907 = vmatpush2.msra.mxu0 %v785
    %908 = vmatprep.subr.mxu0 %v784
    %909 = vmatpush2.msra.mxu0 %v783
    %910 = vmatprep.subr.mxu0 %v782
    %911 = vmatpush2.msra.mxu0 %v781
    %912 = vmatprep.subr.mxu0 %v780
    %913 = vmatpush2.msra.mxu0 %v779
    %914 = vmatprep.subr.mxu0 %v778
    %915 = vmatpush2.msra.mxu0 %v777
    %916 = vmatprep.subr.mxu0 %v776
    %917 = vmatpush2.msra.mxu0 %v775
    %918 = vmatprep.subr.mxu0 %v774
    %919 = vmatpush2.msra.mxu0 %v773
    %920 = vmatprep.subr.mxu0 %v772
    %921 = vmatpush2.msra.mxu0 %v771
    %922 = vmatprep.subr.mxu0 %v770
    %923 = vmatpush2.msra.mxu0 %v769
    %924 = vmatprep.subr.mxu0 %v768
    %925 = vmatpush2.msra.mxu0 %v767
    %926 = vmatprep.subr.mxu0 %v766
    %927 = vmatpush2.msra.mxu0 %v765
    %928 = vmatprep.subr.mxu0 %v764
    %929 = vmatpush2.msra.mxu0 %v763
    %930 = vmatprep.subr.mxu0 %v762
    %931 = vmatpush2.msra.mxu0 %v761
    %932 = vmatprep.mubr.f32.mxu0 %v720
    %933 = vmatmul.mubr.f32.gmra.mxu0 %v719
    %v934 = vpop.f32.mrf.mxu0
    %v935 = vadd.f32 %v861, %v934
    %v936 = vpop.f32.mrf.mxu0
    %v937 = vadd.f32 %v865, %v936
    %938 = vmatprep.mubr.f32.mxu0 %v724
    %939 = vmatmul.mubr.f32.gmra.mxu0 %v723
    %v940 = vpop.f32.mrf.mxu0
    %v941 = vadd.f32 %v861, %v940
    %v942 = vpop.f32.mrf.mxu0
    %v943 = vadd.f32 %v865, %v942
    %944 = vdwg.mxu0
    %945 = vmatprep.subr.mxu0 %v824
    %946 = vmatpush1.msra.mxu0 %v823
    %947 = vmatprep.subr.mxu0 %v822
    %948 = vmatpush1.msra.mxu0 %v821
    %949 = vmatprep.subr.mxu0 %v820
    %950 = vmatpush1.msra.mxu0 %v819
    %951 = vmatprep.subr.mxu0 %v818
    %952 = vmatpush1.msra.mxu0 %v817
    %953 = vmatprep.subr.mxu0 %v816
    %954 = vmatpush1.msra.mxu0 %v815
    %955 = vmatprep.subr.mxu0 %v814
    %956 = vmatpush1.msra.mxu0 %v813
    %957 = vmatprep.subr.mxu0 %v812
    %958 = vmatpush1.msra.mxu0 %v811
    %959 = vmatprep.subr.mxu0 %v810
    %960 = vmatpush1.msra.mxu0 %v809
    %961 = vmatprep.subr.mxu0 %v808
    %962 = vmatpush1.msra.mxu0 %v807
    %963 = vmatprep.subr.mxu0 %v806
    %964 = vmatpush1.msra.mxu0 %v805
    %965 = vmatprep.subr.mxu0 %v804
    %966 = vmatpush1.msra.mxu0 %v803
    %967 = vmatprep.subr.mxu0 %v802
    %968 = vmatpush1.msra.mxu0 %v801
    %969 = vmatprep.subr.mxu0 %v800
    %970 = vmatpush1.msra.mxu0 %v799
    %971 = vmatprep.subr.mxu0 %v798
    %972 = vmatpush1.msra.mxu0 %v797
    %973 = vmatprep.subr.mxu0 %v796
    %974 = vmatpush1.msra.mxu0 %v795
    %975 = vmatprep.subr.mxu0 %v794
    %976 = vmatpush1.msra.mxu0 %v793
    %977 = vmatprep.subr.mxu0 %v856
    %978 = vmatpush2.msra.mxu0 %v855
    %979 = vmatprep.subr.mxu0 %v854
    %980 = vmatpush2.msra.mxu0 %v853
    %981 = vmatprep.subr.mxu0 %v852
    %982 = vmatpush2.msra.mxu0 %v851
    %983 = vmatprep.subr.mxu0 %v850
    %984 = vmatpush2.msra.mxu0 %v849
    %985 = vmatprep.subr.mxu0 %v848
    %986 = vmatpush2.msra.mxu0 %v847
    %987 = vmatprep.subr.mxu0 %v846
    %988 = vmatpush2.msra.mxu0 %v845
    %989 = vmatprep.subr.mxu0 %v844
    %990 = vmatpush2.msra.mxu0 %v843
    %991 = vmatprep.subr.mxu0 %v842
    %992 = vmatpush2.msra.mxu0 %v841
    %993 = vmatprep.subr.mxu0 %v840
    %994 = vmatpush2.msra.mxu0 %v839
    %995 = vmatprep.subr.mxu0 %v838
    %996 = vmatpush2.msra.mxu0 %v837
    %997 = vmatprep.subr.mxu0 %v836
    %998 = vmatpush2.msra.mxu0 %v835
    %999 = vmatprep.subr.mxu0 %v834
    %1000 = vmatpush2.msra.mxu0 %v833
    %1001 = vmatprep.subr.mxu0 %v832
    %1002 = vmatpush2.msra.mxu0 %v831
    %1003 = vmatprep.subr.mxu0 %v830
    %1004 = vmatpush2.msra.mxu0 %v829
    %1005 = vmatprep.subr.mxu0 %v828
    %1006 = vmatpush2.msra.mxu0 %v827
    %1007 = vmatprep.subr.mxu0 %v826
    %1008 = vmatpush2.msra.mxu0 %v825
    %1009 = vmatprep.mubr.f32.mxu0 %v722
    %1010 = vmatmul.mubr.f32.gmra.mxu0 %v721
    %v1011 = vpop.f32.mrf.mxu0
    %v1012 = vadd.f32 %v935, %v1011
    %v1013 = vpop.f32.mrf.mxu0
    %v1014 = vadd.f32 %v937, %v1013
    %1015 = vmatprep.mubr.f32.mxu0 %v726
    %1016 = vmatmul.mubr.f32.gmra.mxu0 %v725
    %v1017 = vpop.f32.mrf.mxu0
    %v1018 = vadd.f32 %v941, %v1017
    %v1019 = vpop.f32.mrf.mxu0
    %v1020 = vadd.f32 %v943, %v1019
    %1021 = vdwg.mxu0
    %v1022 = vmax.f32 %v1012, 0.0
    %v1023 = vmax.f32 %v1014, 0.0
    %v1024 = vmax.f32 %v1018, 0.0
    %v1025 = vmax.f32 %v1020, 0.0
    %v1026 = vld [vmem:[%s3 + $0x5] ss:$0 sm:$0xff]
    %v1027 = vld [vmem:[#allocation7] sm:$0xff]
    %v1028 = vld [vmem:[#allocation7 + $0x8] sm:$0xff]
    %v1029 = vld [vmem:[#allocation7 + $0x10] sm:$0xff]
    %v1030 = vld [vmem:[#allocation7 + $0x18] sm:$0xff]
    %v1031 = vld [vmem:[#allocation7 + $0x20] sm:$0xff]
    %v1032 = vld [vmem:[#allocation7 + $0x28] sm:$0xff]
    %v1033 = vld [vmem:[#allocation7 + $0x30] sm:$0xff]
    %v1034 = vld [vmem:[#allocation7 + $0x38] sm:$0xff]
    %v1035 = vld [vmem:[#allocation7 + $0x40] sm:$0xff]
    %v1036 = vld [vmem:[#allocation7 + $0x48] sm:$0xff]
    %v1037 = vld [vmem:[#allocation7 + $0x50] sm:$0xff]
    %v1038 = vld [vmem:[#allocation7 + $0x58] sm:$0xff]
    %v1039 = vld [vmem:[#allocation7 + $0x60] sm:$0xff]
    %v1040 = vld [vmem:[#allocation7 + $0x68] sm:$0xff]
    %v1041 = vld [vmem:[#allocation7 + $0x70] sm:$0xff]
    %v1042 = vld [vmem:[#allocation7 + $0x78] sm:$0xff]
    %v1043 = vld [vmem:[#allocation7 + $0x80] sm:$0xff]
    %v1044 = vld [vmem:[#allocation7 + $0x88] sm:$0xff]
    %v1045 = vld [vmem:[#allocation7 + $0x90] sm:$0xff]
    %v1046 = vld [vmem:[#allocation7 + $0x98] sm:$0xff]
    %v1047 = vld [vmem:[#allocation7 + $0xa0] sm:$0xff]
    %v1048 = vld [vmem:[#allocation7 + $0xa8] sm:$0xff]
    %v1049 = vld [vmem:[#allocation7 + $0xb0] sm:$0xff]
    %v1050 = vld [vmem:[#allocation7 + $0xb8] sm:$0xff]
    %v1051 = vld [vmem:[#allocation7 + $0xc0] sm:$0xff]
    %v1052 = vld [vmem:[#allocation7 + $0xc8] sm:$0xff]
    %v1053 = vld [vmem:[#allocation7 + $0xd0] sm:$0xff]
    %v1054 = vld [vmem:[#allocation7 + $0xd8] sm:$0xff]
    %v1055 = vld [vmem:[#allocation7 + $0xe0] sm:$0xff]
    %v1056 = vld [vmem:[#allocation7 + $0xe8] sm:$0xff]
    %v1057 = vld [vmem:[#allocation7 + $0xf0] sm:$0xff]
    %v1058 = vld [vmem:[#allocation7 + $0xf8] sm:$0xff]
    %1059 = vmatprep.subr.mxu0 0.0
    %1060 = vmatpush1.msra.mxu0 %v1042
    %1061 = vmatprep.subr.mxu0 0.0
    %1062 = vmatpush1.msra.mxu0 %v1041
    %1063 = vmatprep.subr.mxu0 0.0
    %1064 = vmatpush1.msra.mxu0 %v1040
    %1065 = vmatprep.subr.mxu0 0.0
    %1066 = vmatpush1.msra.mxu0 %v1039
    %1067 = vmatprep.subr.mxu0 0.0
    %1068 = vmatpush1.msra.mxu0 %v1038
    %1069 = vmatprep.subr.mxu0 0.0
    %1070 = vmatpush1.msra.mxu0 %v1037
    %1071 = vmatprep.subr.mxu0 0.0
    %1072 = vmatpush1.msra.mxu0 %v1036
    %1073 = vmatprep.subr.mxu0 0.0
    %1074 = vmatpush1.msra.mxu0 %v1035
    %1075 = vmatprep.subr.mxu0 0.0
    %1076 = vmatpush1.msra.mxu0 %v1034
    %1077 = vmatprep.subr.mxu0 0.0
    %1078 = vmatpush1.msra.mxu0 %v1033
    %1079 = vmatprep.subr.mxu0 0.0
    %1080 = vmatpush1.msra.mxu0 %v1032
    %1081 = vmatprep.subr.mxu0 0.0
    %1082 = vmatpush1.msra.mxu0 %v1031
    %1083 = vmatprep.subr.mxu0 0.0
    %1084 = vmatpush1.msra.mxu0 %v1030
    %1085 = vmatprep.subr.mxu0 0.0
    %1086 = vmatpush1.msra.mxu0 %v1029
    %1087 = vmatprep.subr.mxu0 0.0
    %1088 = vmatpush1.msra.mxu0 %v1028
    %1089 = vmatprep.subr.mxu0 0.0
    %1090 = vmatpush1.msra.mxu0 %v1027
    %1091 = vmatprep.subr.mxu0 0.0
    %1092 = vmatpush2.msra.mxu0 %v1058
    %1093 = vmatprep.subr.mxu0 0.0
    %1094 = vmatpush2.msra.mxu0 %v1057
    %1095 = vmatprep.subr.mxu0 0.0
    %1096 = vmatpush2.msra.mxu0 %v1056
    %1097 = vmatprep.subr.mxu0 0.0
    %1098 = vmatpush2.msra.mxu0 %v1055
    %1099 = vmatprep.subr.mxu0 0.0
    %1100 = vmatpush2.msra.mxu0 %v1054
    %1101 = vmatprep.subr.mxu0 0.0
    %1102 = vmatpush2.msra.mxu0 %v1053
    %1103 = vmatprep.subr.mxu0 0.0
    %1104 = vmatpush2.msra.mxu0 %v1052
    %1105 = vmatprep.subr.mxu0 0.0
    %1106 = vmatpush2.msra.mxu0 %v1051
    %1107 = vmatprep.subr.mxu0 0.0
    %1108 = vmatpush2.msra.mxu0 %v1050
    %1109 = vmatprep.subr.mxu0 0.0
    %1110 = vmatpush2.msra.mxu0 %v1049
    %1111 = vmatprep.subr.mxu0 0.0
    %1112 = vmatpush2.msra.mxu0 %v1048
    %1113 = vmatprep.subr.mxu0 0.0
    %1114 = vmatpush2.msra.mxu0 %v1047
    %1115 = vmatprep.subr.mxu0 0.0
    %1116 = vmatpush2.msra.mxu0 %v1046
    %1117 = vmatprep.subr.mxu0 0.0
    %1118 = vmatpush2.msra.mxu0 %v1045
    %1119 = vmatprep.subr.mxu0 0.0
    %1120 = vmatpush2.msra.mxu0 %v1044
    %1121 = vmatprep.subr.mxu0 0.0
    %1122 = vmatpush2.msra.mxu0 %v1043
    %1123 = vmatprep.mubr.f32.mxu0 %v1023
    %1124 = vmatmul.mubr.f32.gmra.mxu0 %v1022
    %v1125 = vpop.f32.mrf.mxu0
    %v1126 = vadd.f32 %v1026, %v1125
    %v1127 = vpop.f32.mrf.mxu0
    %1128 = vmatprep.mubr.f32.mxu0 %v1025
    %1129 = vmatmul.mubr.f32.gmra.mxu0 %v1024
    %v1130 = vpop.f32.mrf.mxu0
    %v1131 = vadd.f32 %v1026, %v1130
    %v1132 = vpop.f32.mrf.mxu0
    %1133 = vdwg.mxu0
    %v1134 = vmax.f32 %v1126, 0.0
    %v1135 = vmax.f32 %v1131, 0.0
    %v1136 = vld [vmem:[%s3 + $0x6] ss:$0 sm:$0xff]
    %v1137 = vld [vmem:[%s10] sm:$0xff]
    %v1138 = vld [vmem:[%s10 + $0x8] sm:$0xff]
    %v1139 = vld [vmem:[%s10 + $0x10] sm:$0xff]
    %v1140 = vld [vmem:[%s10 + $0x18] sm:$0xff]
    %v1141 = vld [vmem:[%s10 + $0x20] sm:$0xff]
    %v1142 = vld [vmem:[%s10 + $0x28] sm:$0xff]
    %v1143 = vld [vmem:[%s10 + $0x30] sm:$0xff]
    %v1144 = vld [vmem:[%s10 + $0x38] sm:$0xff]
    %v1145 = vld [vmem:[%s10 + $0x40] sm:$0xff]
    %v1146 = vld [vmem:[%s10 + $0x48] sm:$0xff]
    %v1147 = vld [vmem:[%s10 + $0x50] sm:$0xff]
    %v1148 = vld [vmem:[%s10 + $0x58] sm:$0xff]
    %v1149 = vld [vmem:[%s10 + $0x60] sm:$0xff]
    %v1150 = vld [vmem:[%s10 + $0x68] sm:$0xff]
    %v1151 = vld [vmem:[%s10 + $0x70] sm:$0xff]
    %v1152 = vld [vmem:[%s10 + $0x78] sm:$0xff]
    %1153 = vmatprep.subr.mxu0 0.0
    %1154 = vmatpush1.msra.mxu0 %v1152
    %1155 = vmatprep.subr.mxu0 0.0
    %1156 = vmatpush1.msra.mxu0 %v1151
    %1157 = vmatprep.subr.mxu0 0.0
    %1158 = vmatpush1.msra.mxu0 %v1150
    %1159 = vmatprep.subr.mxu0 0.0
    %1160 = vmatpush1.msra.mxu0 %v1149
    %1161 = vmatprep.subr.mxu0 0.0
    %1162 = vmatpush1.msra.mxu0 %v1148
    %1163 = vmatprep.subr.mxu0 0.0
    %1164 = vmatpush1.msra.mxu0 %v1147
    %1165 = vmatprep.subr.mxu0 0.0
    %1166 = vmatpush1.msra.mxu0 %v1146
    %1167 = vmatprep.subr.mxu0 0.0
    %1168 = vmatpush1.msra.mxu0 %v1145
    %1169 = vmatprep.subr.mxu0 0.0
    %1170 = vmatpush1.msra.mxu0 %v1144
    %1171 = vmatprep.subr.mxu0 0.0
    %1172 = vmatpush1.msra.mxu0 %v1143
    %1173 = vmatprep.subr.mxu0 0.0
    %1174 = vmatpush1.msra.mxu0 %v1142
    %1175 = vmatprep.subr.mxu0 0.0
    %1176 = vmatpush1.msra.mxu0 %v1141
    %1177 = vmatprep.subr.mxu0 0.0
    %1178 = vmatpush1.msra.mxu0 %v1140
    %1179 = vmatprep.subr.mxu0 0.0
    %1180 = vmatpush1.msra.mxu0 %v1139
    %1181 = vmatprep.subr.mxu0 0.0
    %1182 = vmatpush1.msra.mxu0 %v1138
    %1183 = vmatprep.subr.mxu0 0.0
    %1184 = vmatpush1.msra.mxu0 %v1137
    %1185 = vmatprep.subr.mxu0 0.0
    %1186 = vmatpush2.msra.mxu0 0.0
    %1187 = vmatprep.subr.mxu0 0.0
    %1188 = vmatpush2.msra.mxu0 0.0
    %1189 = vmatprep.subr.mxu0 0.0
    %1190 = vmatpush2.msra.mxu0 0.0
    %1191 = vmatprep.subr.mxu0 0.0
    %1192 = vmatpush2.msra.mxu0 0.0
    %1193 = vmatprep.subr.mxu0 0.0
    %1194 = vmatpush2.msra.mxu0 0.0
    %1195 = vmatprep.subr.mxu0 0.0
    %1196 = vmatpush2.msra.mxu0 0.0
    %1197 = vmatprep.subr.mxu0 0.0
    %1198 = vmatpush2.msra.mxu0 0.0
    %1199 = vmatprep.subr.mxu0 0.0
    %1200 = vmatpush2.msra.mxu0 0.0
    %1201 = vmatprep.subr.mxu0 0.0
    %1202 = vmatpush2.msra.mxu0 0.0
    %1203 = vmatprep.subr.mxu0 0.0
    %1204 = vmatpush2.msra.mxu0 0.0
    %1205 = vmatprep.subr.mxu0 0.0
    %1206 = vmatpush2.msra.mxu0 0.0
    %1207 = vmatprep.subr.mxu0 0.0
    %1208 = vmatpush2.msra.mxu0 0.0
    %1209 = vmatprep.subr.mxu0 0.0
    %1210 = vmatpush2.msra.mxu0 0.0
    %1211 = vmatprep.subr.mxu0 0.0
    %1212 = vmatpush2.msra.mxu0 0.0
    %1213 = vmatprep.subr.mxu0 0.0
    %1214 = vmatpush2.msra.mxu0 0.0
    %1215 = vmatprep.subr.mxu0 0.0
    %1216 = vmatpush2.msra.mxu0 0.0
    %1217 = vmatprep.mubr.f32.mxu0 0.0
    %1218 = vmatmul.mubr.f32.gmra.mxu0 %v1134
    %v1219 = vpop.f32.mrf.mxu0
    %v1220 = vadd.f32 %v1136, %v1219
    %v1221 = vpop.f32.mrf.mxu0
    %1222 = vmatprep.mubr.f32.mxu0 0.0
    %1223 = vmatmul.mubr.f32.gmra.mxu0 %v1135
    %v1224 = vpop.f32.mrf.mxu0
    %v1225 = vadd.f32 %v1136, %v1224
    %v1226 = vpop.f32.mrf.mxu0
    %1227 = vdwg.mxu0
    %v1228 = vtanh.pop %v1220
    %v1229 = vtanh.pop %v1225
    %v1230 = vld [vmem:[%s3 + $0x7] ss:$0 sm:$0xff]
    %v1231 = vld [vmem:[%s11] sm:$0xff]
    %v1232 = vld [vmem:[%s11 + $0x8] sm:$0xff]
    %v1233 = vld [vmem:[%s11 + $0x10] sm:$0xff]
    %v1234 = vld [vmem:[%s11 + $0x18] sm:$0xff]
    %v1235 = vld [vmem:[%s11 + $0x20] sm:$0xff]
    %v1236 = vld [vmem:[%s11 + $0x28] sm:$0xff]
    %v1237 = vld [vmem:[%s11 + $0x30] sm:$0xff]
    %v1238 = vld [vmem:[%s11 + $0x38] sm:$0xff]
    %v1240 = vsel %vm197, %v1228, 0
    %v1243 = vsel %vm197, %v1229, 0
    %1245 = vmatprep.subr.mxu0 0.0
    %1246 = vmatpush1.msra.mxu0 0.0
    %1247 = vmatprep.subr.mxu0 0.0
    %1248 = vmatpush1.msra.mxu0 0.0
    %1249 = vmatprep.subr.mxu0 0.0
    %1250 = vmatpush1.msra.mxu0 0.0
    %1251 = vmatprep.subr.mxu0 0.0
    %1252 = vmatpush1.msra.mxu0 0.0
    %1253 = vmatprep.subr.mxu0 0.0
    %1254 = vmatpush1.msra.mxu0 0.0
    %1255 = vmatprep.subr.mxu0 0.0
    %1256 = vmatpush1.msra.mxu0 0.0
    %1257 = vmatprep.subr.mxu0 0.0
    %1258 = vmatpush1.msra.mxu0 0.0
    %1259 = vmatprep.subr.mxu0 0.0
    %1260 = vmatpush1.msra.mxu0 0.0
    %1261 = vmatprep.subr.mxu0 0.0
    %1262 = vmatpush1.msra.mxu0 %v1238
    %1263 = vmatprep.subr.mxu0 0.0
    %1264 = vmatpush1.msra.mxu0 %v1237
    %1265 = vmatprep.subr.mxu0 0.0
    %1266 = vmatpush1.msra.mxu0 %v1236
    %1267 = vmatprep.subr.mxu0 0.0
    %1268 = vmatpush1.msra.mxu0 %v1235
    %1269 = vmatprep.subr.mxu0 0.0
    %1270 = vmatpush1.msra.mxu0 %v1234
    %1271 = vmatprep.subr.mxu0 0.0
    %1272 = vmatpush1.msra.mxu0 %v1233
    %1273 = vmatprep.subr.mxu0 0.0
    %1274 = vmatpush1.msra.mxu0 %v1232
    %1275 = vmatprep.subr.mxu0 0.0
    %1276 = vmatpush1.msra.mxu0 %v1231
    %1277 = vmatprep.subr.mxu0 0.0
    %1278 = vmatpush2.msra.mxu0 0.0
    %1279 = vmatprep.subr.mxu0 0.0
    %1280 = vmatpush2.msra.mxu0 0.0
    %1281 = vmatprep.subr.mxu0 0.0
    %1282 = vmatpush2.msra.mxu0 0.0
    %1283 = vmatprep.subr.mxu0 0.0
    %1284 = vmatpush2.msra.mxu0 0.0
    %1285 = vmatprep.subr.mxu0 0.0
    %1286 = vmatpush2.msra.mxu0 0.0
    %1287 = vmatprep.subr.mxu0 0.0
    %1288 = vmatpush2.msra.mxu0 0.0
    %1289 = vmatprep.subr.mxu0 0.0
    %1290 = vmatpush2.msra.mxu0 0.0
    %1291 = vmatprep.subr.mxu0 0.0
    %1292 = vmatpush2.msra.mxu0 0.0
    %1293 = vmatprep.subr.mxu0 0.0
    %1294 = vmatpush2.msra.mxu0 0.0
    %1295 = vmatprep.subr.mxu0 0.0
    %1296 = vmatpush2.msra.mxu0 0.0
    %1297 = vmatprep.subr.mxu0 0.0
    %1298 = vmatpush2.msra.mxu0 0.0
    %1299 = vmatprep.subr.mxu0 0.0
    %1300 = vmatpush2.msra.mxu0 0.0
    %1301 = vmatprep.subr.mxu0 0.0
    %1302 = vmatpush2.msra.mxu0 0.0
    %1303 = vmatprep.subr.mxu0 0.0
    %1304 = vmatpush2.msra.mxu0 0.0
    %1305 = vmatprep.subr.mxu0 0.0
    %1306 = vmatpush2.msra.mxu0 0.0
    %1307 = vmatprep.subr.mxu0 0.0
    %1308 = vmatpush2.msra.mxu0 0.0
    %1309 = vmatprep.mubr.f32.mxu0 0.0
    %1310 = vmatmul.mubr.f32.gmra.mxu0 %v1240
    %v1311 = vpop.f32.mrf.mxu0
    %v1312 = vadd.f32 %v1230, %v1311
    %v1313 = vpop.f32.mrf.mxu0
    %1314 = vmatprep.mubr.f32.mxu0 0.0
    %1315 = vmatmul.mubr.f32.gmra.mxu0 %v1243
    %v1316 = vpop.f32.mrf.mxu0
    %v1317 = vadd.f32 %v1230, %v1316
    %v1318 = vpop.f32.mrf.mxu0
    %1319 = vdwg.mxu0
    %v1320 = vtanh.pop %v1312
    %v1321 = vtanh.pop %v1317
    %v1322 = vld [vmem:[%s1] sm:$0xff]
    %v1323 = vld [vmem:[%s1 + $0x8] sm:$0xff]
    %v1324 = vsub.f32 %v1322, %v1320
    %v1325 = vsub.f32 %v1323, %v1321
    %v1326 = vmul.f32 %v1324, %v1324
    %v1327 = vmul.f32 %v1325, %v1325
    %v1328 = vld [vmem:[%s2] sm:$0x1]
    %v1330 = vlaneseq
    %v1331 = vshrl.u32 %v1330, 7
    %v1332 = vsub.s32 0, %v1331
    %v1333 = vrot.slane %v1328, %v1332
    %v1335 = vmul.f32 %v1326, %v1333
    %v1336 = vmul.f32 %v1327, %v1333
    %vm1337 = vcmask 15360
    %v1338 = vsel %vm1337, %v1335, 0.0
    %1339 = vadd.xlane.f32.xlu0 %v1338
    %v1340 = vpop.xlane.xlu0 %1339
    %v1341 = vsel %vm1337, %v1336, 0.0
    %1342 = vadd.xlane.f32.xlu0 %v1341
    %v1343 = vpop.xlane.xlu0 %1342
    %vm1344 = vcmp.eq.s32.totalorder %v280, 0
    %1346 = vset.pattern.permute.xlu0 2
    %1347 = vperm.xlu0 %1346, %v1312
    %v1348 = vpop.permute.xlu0 %1347
    %1351 = vset.pattern.permute.xlu0 2
    %1352 = vperm.xlu0 %1351, %v1317
    %v1353 = vpop.permute.xlu0 %1352
    %v1355 = vsel %vm1344, %v1340, %v1348
    %v1356 = vsel %vm1344, %v1343, %v1353
    %1357 = vst.msk [vmem:[%s12] sm:$0xff] %vm1337, %v1355
    %1358 = vst.msk [vmem:[%s12 + $0x8] sm:$0xff] %vm1337, %v1356
    // Predicated region
    $region66: #{tpu_custom_call.1} parent=1 // pred_check
      _
    $region67: #{tpu_custom_call.1} parent=1 // pred_check_branch
      %1360 = sbr.rel (0) target = $region69
    $region68: #{tpu_custom_call.1} parent=1 // pred_region
      _
    $region69: #{tpu_custom_call.1} parent=1 // pred_fallthru
      _
    // Predicated region
    $region70: #{tpu_custom_call.1} parent=1 // pred_check
      _
    $region71: #{tpu_custom_call.1} parent=1 // pred_check_branch
      %1362 = sbr.rel (0) target = $region73
    $region72: #{tpu_custom_call.1} parent=1 // pred_region
      _
    $region73: #{tpu_custom_call.1} parent=1 // pred_fallthru
      _
    %1363 = vsyncpa [#allocation3], 1
    %1364 = vsyncpa [#allocation5], 1
    %1365 = vsyncpa [#allocation8], 1

</llo_original>
